<compile_context>
chip_gen: v5e
topology: v5e:2x2
jax: 0.10.0
libtpu: 0.0.40
codegen_flags: <defaults>
</compile_context>

<pallas_src>
import functools

import jax
import jax.numpy as jnp
from jax.experimental import pallas as pl
from jax.experimental.pallas import tpu as pltpu

MEM_DIM = 16
NODE_DIM = 16
EDGE_DIM = 8
TIME_DIM = 8
HID = MEM_DIM + NODE_DIM          # in_channels == out_channels of CTANEmbedding
NUM_ITERS = 2
EPSILON = 0.1
GAMMA = 0.1
MEAN_DT = 0.0
STD_DT = 1.0


def ctan_kernel(x0_ref, ekv_ref, S_ref, A_ref, wx_ref, bx_ref, ws_ref, out_ref):
    # One grid step = GROUP subgraphs stacked block-diagonally.
    S = S_ref[0]                       # [GE, GN]  bf16 one-hot of edge source (x_j gather)
    A = A_ref[0]                       # [GN, GE]  bf16 dst incidence (node i <- edge e)
    mask = A > 0                       # hoisted: reused by both jnp.where calls, all iters
    Wx = wx_ref[...]                   # [HID, 3*HID] bf16  = [Wq | Wsk | Wa]
    Ws = ws_ref[...]                   # [HID, 2*HID] bf16  = [Wk | Wv]
    bx = bx_ref[...]                   # [1, 3*HID]   f32   = [bq | bsk | ba]
    ekv = ekv_ref[...]                 # [GE, 2*HID]  f32   = [e_proj+bk | e_proj+bv]

    x = x0_ref[...]                    # [GN, HID] f32 node state (Euler integrator state)
    inv_sqrt = jnp.float32(1.0 / (HID ** 0.5))
    neg = jnp.float32(-1e30)

    for _ in range(NUM_ITERS):         # static unroll (num_iters is a hyperparameter)
        xb = x.astype(jnp.bfloat16)

        # --- node-side projections: q / skip(root) / antisymmetric-linear in one matmul ---
        xw = jnp.dot(xb, Wx, preferred_element_type=jnp.float32) + bx      # [GN, 3H]
        q = xw[:, :HID]
        skip = xw[:, HID:2 * HID]
        lin = xw[:, 2 * HID:]

        # --- edge-side: gather x_j then project to k / v in one matmul ---
        xs = jnp.dot(S, xb, preferred_element_type=jnp.float32)            # x_j  [GE, H]
        kv = jnp.dot(xs.astype(jnp.bfloat16), Ws,
                     preferred_element_type=jnp.float32) + ekv             # [GE, 2H]
        k = kv[:, :HID]
        v = kv[:, HID:]

        # --- TransformerConv segment softmax (dense, masked by incidence) ---
        scores = jax.lax.dot_general(q.astype(jnp.bfloat16), k.astype(jnp.bfloat16),
                                     (((1,), (1,)), ((), ())),
                                     preferred_element_type=jnp.float32) * inv_sqrt  # [GN, GE]
        L = jnp.where(mask, scores, neg)
        m = jnp.max(L, axis=-1, keepdims=True)
        p = jnp.where(mask, jnp.exp(L - m), 0.0)     # second where is load-bearing for
        s = jnp.sum(p, axis=-1, keepdims=True)       # isolated destination nodes
        p = p * pl.reciprocal(jnp.where(s > 0, s, 1.0), approx=True)
        agg = jnp.dot(p.astype(jnp.bfloat16), v.astype(jnp.bfloat16),
                      preferred_element_type=jnp.float32)                  # [GN, H]

        # --- anti-symmetric Euler step ---
        h = jnp.tanh(lin + agg + skip)
        x = x + EPSILON * h

    out_ref[...] = x


def init_params(key):
    ks = jax.random.split(key, 16)
    lin = lambda k, i, o: jax.random.normal(k, (i, o), jnp.float32) * 0.1
    vec = lambda k, o, s=0.1: jax.random.normal(k, (1, o), jnp.float32) * s
    # MXU weights stored pre-rounded to bf16 (held in f32) so kernel's bf16 cast is exact.
    q = lambda w: w.astype(jnp.bfloat16).astype(jnp.float32)
    W = jax.random.normal(ks[0], (HID, HID), jnp.float32) * 0.1
    wa = q((W - W.T - GAMMA * jnp.eye(HID, dtype=jnp.float32)).T)   # so that x @ wa
    return dict(
        w_time=vec(ks[1], TIME_DIM, 0.5), b_time=vec(ks[2], TIME_DIM),
        we_t=lin(ks[3], TIME_DIM, HID), we_m=lin(ks[4], EDGE_DIM, HID),
        wq=q(lin(ks[5], HID, HID)), bq=vec(ks[6], HID),
        wk=q(lin(ks[7], HID, HID)), bk=vec(ks[8], HID),
        wv=q(lin(ks[9], HID, HID)), bv=vec(ks[10], HID),
        wsk=q(lin(ks[11], HID, HID)), bsk=vec(ks[12], HID),
        wa=wa, ba=vec(ks[13], HID),
    )


def ctan_forward(params, memory, last_update_all, x_all, n_id, msg, t, edge_index,
                 group=8):
    """Batched CTAN forward.

    n_id:        [B, N]   global node ids of each sampled subgraph
    edge_index:  [B, 2, E] local (0..N-1) src/dst indices per subgraph
    t:           [B, E]    event times
    msg:         [B, E, EDGE_DIM]
    returns      [B, N, HID] node embeddings
    """
    B, N = n_id.shape
    E = edge_index.shape[-1]
    assert B % group == 0, "batch must be a multiple of the subgraph group size"
    T = B // group
    GN, GE = group * N, group * E

    # ---- glue: SimpleMemory lookup + node-feature concat ----
    z0 = jnp.concatenate([memory[n_id], x_all[n_id]], axis=-1).astype(jnp.float32)  # [B,N,H]
    lu = last_update_all[n_id].astype(jnp.float32)                                   # [B,N]

    # ---- iteration-invariant time encoding + lin_edge (hoisted out of the kernel) ----
    src, dst = edge_index[:, 0, :], edge_index[:, 1, :]                              # [B,E]
    lu_src = jnp.take_along_axis(lu, src, axis=1)                                    # [B,E]
    # NOTE: rel_t follows the PyG TGN convention last_update[src] - t (then normalized).
    rel_t = (lu_src - t.astype(jnp.float32) - MEAN_DT) / STD_DT
    enc = jnp.cos(rel_t[..., None] * params['w_time'] + params['b_time'])            # [B,E,T]
    e_proj = enc @ params['we_t'] + msg.astype(jnp.float32) @ params['we_m']          # [B,E,H]
    ekv = jnp.concatenate([e_proj + params['bk'], e_proj + params['bv']], axis=-1)    # [B,E,2H]

    # ---- block-diagonal one-hot incidence per tile of `group` subgraphs ----
    off = ((jnp.arange(B) % group) * N)[:, None]                                     # [B,1]
    S = jax.nn.one_hot((src + off).reshape(T, GE), GN, dtype=jnp.bfloat16)           # [T,GE,GN]
    A = jnp.swapaxes(
        jax.nn.one_hot((dst + off).reshape(T, GE), GN, dtype=jnp.bfloat16), 1, 2)    # [T,GN,GE]

    # ---- packed parameter slabs (weights already bf16-representable) ----
    wx = jnp.concatenate([params['wq'], params['wsk'], params['wa']],
                         axis=1).astype(jnp.bfloat16)                                # [H,3H]
    bx = jnp.concatenate([params['bq'], params['bsk'], params['ba']], axis=1)        # [1,3H]
    ws = jnp.concatenate([params['wk'], params['wv']], axis=1).astype(jnp.bfloat16)  # [H,2H]

    x0 = z0.reshape(T * GN, HID)
    ekv2 = ekv.reshape(T * GE, 2 * HID)

    # ---- cost estimate (lets XLA schedule surrounding glue around the custom call) ----
    mm_flops = 2 * (GN * HID * 3 * HID + GE * GN * HID + GE * HID * 2 * HID
                    + 2 * GN * GE * HID)
    cost = pl.CostEstimate(
        flops=int(T * NUM_ITERS * mm_flops),
        transcendentals=int(T * NUM_ITERS * (GN * GE + GN * HID)),
        bytes_accessed=int((x0.size + ekv2.size + bx.size + T * GN * HID) * 4
                           + (S.size + A.size + wx.size + ws.size) * 2),
    )

    out = pl.pallas_call(
        ctan_kernel,
        out_shape=jax.ShapeDtypeStruct((T * GN, HID), jnp.float32),
        grid=(T,),
        in_specs=[
            pl.BlockSpec((GN, HID), lambda b: (b, 0)),          # x0
            pl.BlockSpec((GE, 2 * HID), lambda b: (b, 0)),      # e_proj + bk|bv
            pl.BlockSpec((1, GE, GN), lambda b: (b, 0, 0)),     # S
            pl.BlockSpec((1, GN, GE), lambda b: (b, 0, 0)),     # A
            pl.BlockSpec((HID, 3 * HID), lambda b: (0, 0)),     # W_x slab (fetched once)
            pl.BlockSpec((1, 3 * HID), lambda b: (0, 0)),       # b_x slab
            pl.BlockSpec((HID, 2 * HID), lambda b: (0, 0)),     # W_s slab
        ],
        out_specs=pl.BlockSpec((GN, HID), lambda b: (b, 0)),
        compiler_params=pltpu.CompilerParams(dimension_semantics=("parallel",)),
        cost_estimate=cost,
    )(x0, ekv2, S, A, wx, bx, ws)
    return out.reshape(B, N, HID)


def reference_one(params, z0, lu_n, te, msg, src, dst):
    """Pure-JAX reference (segment ops) mirroring the PyTorch semantics, one subgraph."""
    N = z0.shape[0]
    rel_t = (lu_n[src] - te - MEAN_DT) / STD_DT
    enc = jnp.cos(rel_t[:, None] * params['w_time'] + params['b_time'])
    e_proj = enc @ params['we_t'] + msg @ params['we_m']
    x = z0
    inv = 1.0 / jnp.sqrt(HID)
    for _ in range(NUM_ITERS):
        q = x @ params['wq'] + params['bq']
        k = x[src] @ params['wk'] + params['bk'] + e_proj
        v = x[src] @ params['wv'] + params['bv'] + e_proj
        logits = jnp.sum(q[dst] * k, axis=-1) * inv
        mx = jax.ops.segment_max(logits, dst, num_segments=N)
        ex = jnp.exp(logits - mx[dst])
        den = jax.ops.segment_sum(ex, dst, num_segments=N)
        alpha = ex / jnp.where(den > 0, den, 1.0)[dst]          # guard isolated dst nodes
        agg = jax.ops.segment_sum(alpha[:, None] * v, dst, num_segments=N)
        conv = agg + x @ params['wsk'] + params['bsk']
        h = jnp.tanh(x @ params['wa'] + params['ba'] + conv)
        x = x + EPSILON * h
    return x


if __name__ == "__main__":
    key = jax.random.PRNGKey(0)
    k1, k2, k3, k4, k5, k6, k7, kp = jax.random.split(key, 8)

    NUM_TOTAL_NODES = 64   # nodes in the full graph (memory table size)
    B = 16                 # batched subgraphs (events)
    N = 16                 # nodes per sampled subgraph
    E = 16                 # temporal edges per subgraph
    GROUP = 8              # subgraphs per grid tile -> 128 node/edge rows per tile

    memory = jax.random.normal(k1, (NUM_TOTAL_NODES, MEM_DIM), jnp.float32)
    last_update_all = jax.random.uniform(k2, (NUM_TOTAL_NODES,), jnp.float32, 0.0, 10.0)
    x_all = jax.random.normal(k3, (NUM_TOTAL_NODES, NODE_DIM), jnp.float32)
    n_id = jax.random.randint(k4, (B, N), 0, NUM_TOTAL_NODES)
    edge_index = jax.random.randint(k5, (B, 2, E), 0, N)          # local indices per subgraph
    t = jax.random.uniform(k6, (B, E), jnp.float32, 0.0, 10.0)
    msg = jax.random.normal(k7, (B, E, EDGE_DIM), jnp.float32)

    params = init_params(kp)

    out = ctan_forward(params, memory, last_update_all, x_all, n_id, msg, t, edge_index,
                       group=GROUP)
    out = jax.block_until_ready(out)

    # correctness check against a pure-JAX reference (vmapped over the batch)
    z0 = jnp.concatenate([memory[n_id], x_all[n_id]], axis=-1).astype(jnp.float32)
    lu = last_update_all[n_id].astype(jnp.float32)
    ref = jax.vmap(functools.partial(reference_one, params))(
        z0, lu, t, msg, edge_index[:, 0, :], edge_index[:, 1, :])

    assert out.shape == (B, N, HID)
    assert bool(jnp.all(jnp.isfinite(out)))
    max_err = float(jnp.max(jnp.abs(out - ref)))
    assert max_err < 2e-2, max_err   # bf16 MXU operands vs f32 reference

    # TODO(synk): memory.update_state / reset_state / detach (stateful bookkeeping outside
    # the forward hot path) are not translated.
    print("KERNEL_OK")
</pallas_src>

<mosaic_0001>
module attributes {stable_mosaic.version = 11 : i64} {
  func.func @ctan_kernel(%arg0: i32, %arg1: memref<128x32xf32, #tpu.memory_space<vmem>>, %arg2: memref<128x64xf32, #tpu.memory_space<vmem>>, %arg3: memref<1x128x128xbf16, #tpu.memory_space<vmem>>, %arg4: memref<1x128x128xbf16, #tpu.memory_space<vmem>>, %arg5: memref<32x96xbf16, #tpu.memory_space<vmem>>, %arg6: memref<1x96xf32, #tpu.memory_space<vmem>>, %arg7: memref<32x64xbf16, #tpu.memory_space<vmem>>, %arg8: memref<128x32xf32, #tpu.memory_space<vmem>>) attributes {dimension_semantics = [#tpu.dimension_semantics<parallel>], iteration_bounds = array<i64: 2>, scalar_prefetch = 0 : i64, scratch_operands = 0 : i64, tpu.core_type = #tpu.core_type<tc>, window_params = [{transform_indices = @transform_0, window_bounds = array<i64: 128, 32>}, {transform_indices = @transform_1, window_bounds = array<i64: 128, 64>}, {transform_indices = @transform_2, window_bounds = array<i64: 1, 128, 128>}, {transform_indices = @transform_3, window_bounds = array<i64: 1, 128, 128>}, {pipeline_mode = #tpu.pipeline_mode<synchronous>, transform_indices = @transform_4, window_bounds = array<i64: 32, 96>}, {pipeline_mode = #tpu.pipeline_mode<synchronous>, transform_indices = @transform_5, window_bounds = array<i64: 1, 96>}, {pipeline_mode = #tpu.pipeline_mode<synchronous>, transform_indices = @transform_6, window_bounds = array<i64: 32, 64>}, {transform_indices = @transform_7, window_bounds = array<i64: 128, 32>}]} {
    %c0 = arith.constant 0 : index
    %c0_0 = arith.constant 0 : index
    %c0_1 = arith.constant 0 : index
    %0 = vector.load %arg3[%c0, %c0_0, %c0_1] : memref<1x128x128xbf16, #tpu.memory_space<vmem>>, vector<1x128x128xbf16>
    %1 = vector.shape_cast %0 : vector<1x128x128xbf16> to vector<128x128xbf16>
    %c0_2 = arith.constant 0 : index
    %c0_3 = arith.constant 0 : index
    %c0_4 = arith.constant 0 : index
    %2 = vector.load %arg4[%c0_2, %c0_3, %c0_4] : memref<1x128x128xbf16, #tpu.memory_space<vmem>>, vector<1x128x128xbf16>
    %3 = vector.shape_cast %2 : vector<1x128x128xbf16> to vector<128x128xbf16>
    %cst = arith.constant 0.000000e+00 : bf16
    %4 = vector.broadcast %cst : bf16 to vector<128x128xbf16>
    %5 = arith.cmpf ogt, %3, %4 : vector<128x128xbf16>
    %c0_5 = arith.constant 0 : index
    %c0_6 = arith.constant 0 : index
    %6 = vector.load %arg5[%c0_5, %c0_6] : memref<32x96xbf16, #tpu.memory_space<vmem>>, vector<32x96xbf16>
    %c0_7 = arith.constant 0 : index
    %c0_8 = arith.constant 0 : index
    %7 = vector.load %arg7[%c0_7, %c0_8] : memref<32x64xbf16, #tpu.memory_space<vmem>>, vector<32x64xbf16>
    %c0_9 = arith.constant 0 : index
    %c0_10 = arith.constant 0 : index
    %8 = vector.load %arg6[%c0_9, %c0_10] : memref<1x96xf32, #tpu.memory_space<vmem>>, vector<1x96xf32>
    %c0_11 = arith.constant 0 : index
    %c0_12 = arith.constant 0 : index
    %9 = vector.load %arg2[%c0_11, %c0_12] : memref<128x64xf32, #tpu.memory_space<vmem>>, vector<128x64xf32>
    %c0_13 = arith.constant 0 : index
    %c0_14 = arith.constant 0 : index
    %10 = vector.load %arg1[%c0_13, %c0_14] : memref<128x32xf32, #tpu.memory_space<vmem>>, vector<128x32xf32>
    %11 = arith.truncf %10 : vector<128x32xf32> to vector<128x32xbf16>
    %cst_15 = arith.constant dense<0.000000e+00> : vector<128x96xf32>
    %12 = tpu.matmul %11, %6, %cst_15 {dimension_numbers = #tpu.dot_dimension_numbers<[1], [0], [0], [1], [0, 0, 1, 1], [], []>} : vector<128x32xbf16>, vector<32x96xbf16>, vector<128x96xf32> -> vector<128x96xf32>
    %13 = vector.broadcast %8 : vector<1x96xf32> to vector<128x96xf32>
    %14 = arith.addf %12, %13 : vector<128x96xf32>
    %15 = vector.extract_strided_slice %14 {offsets = [0, 0], sizes = [128, 32], strides = [1, 1]} : vector<128x96xf32> to vector<128x32xf32>
    %16 = vector.extract_strided_slice %14 {offsets = [0, 32], sizes = [128, 32], strides = [1, 1]} : vector<128x96xf32> to vector<128x32xf32>
    %17 = vector.extract_strided_slice %14 {offsets = [0, 64], sizes = [128, 32], strides = [1, 1]} : vector<128x96xf32> to vector<128x32xf32>
    %cst_16 = arith.constant dense<0.000000e+00> : vector<128x32xf32>
    %18 = tpu.matmul %1, %11, %cst_16 {dimension_numbers = #tpu.dot_dimension_numbers<[1], [0], [0], [1], [0, 0, 1, 1], [], []>} : vector<128x128xbf16>, vector<128x32xbf16>, vector<128x32xf32> -> vector<128x32xf32>
    %19 = arith.truncf %18 : vector<128x32xf32> to vector<128x32xbf16>
    %cst_17 = arith.constant dense<0.000000e+00> : vector<128x64xf32>
    %20 = tpu.matmul %19, %7, %cst_17 {dimension_numbers = #tpu.dot_dimension_numbers<[1], [0], [0], [1], [0, 0, 1, 1], [], []>} : vector<128x32xbf16>, vector<32x64xbf16>, vector<128x64xf32> -> vector<128x64xf32>
    %21 = arith.addf %20, %9 : vector<128x64xf32>
    %22 = vector.extract_strided_slice %21 {offsets = [0, 0], sizes = [128, 32], strides = [1, 1]} : vector<128x64xf32> to vector<128x32xf32>
    %23 = vector.extract_strided_slice %21 {offsets = [0, 32], sizes = [128, 32], strides = [1, 1]} : vector<128x64xf32> to vector<128x32xf32>
    %24 = arith.truncf %15 : vector<128x32xf32> to vector<128x32xbf16>
    %25 = arith.truncf %22 : vector<128x32xf32> to vector<128x32xbf16>
    %cst_18 = arith.constant dense<0.000000e+00> : vector<128x128xf32>
    %26 = tpu.matmul %24, %25, %cst_18 {dimension_numbers = #tpu.dot_dimension_numbers<[1], [1], [0], [0], [0, 0, 1, 0], [], []>} : vector<128x32xbf16>, vector<128x32xbf16>, vector<128x128xf32> -> vector<128x128xf32>
    %cst_19 = arith.constant 0.176776692 : f32
    %27 = vector.broadcast %cst_19 : f32 to vector<128x128xf32>
    %28 = arith.mulf %26, %27 : vector<128x128xf32>
    %cst_20 = arith.constant -1.000000e+30 : f32
    %29 = vector.broadcast %cst_20 : f32 to vector<128x128xf32>
    %30 = arith.select %5, %28, %29 : vector<128x128xi1>, vector<128x128xf32>
    %cst_21 = arith.constant dense<0xFF800000> : vector<128xf32>
    %31 = vector.multi_reduction <maximumf>, %30, %cst_21 [1] : vector<128x128xf32> to vector<128xf32>
    %32 = vector.shape_cast %31 : vector<128xf32> to vector<128x1xf32>
    %33 = vector.broadcast %32 : vector<128x1xf32> to vector<128x128xf32>
    %34 = arith.subf %30, %33 : vector<128x128xf32>
    %35 = math.exp %34 : vector<128x128xf32>
    %cst_22 = arith.constant 0.000000e+00 : f32
    %36 = vector.broadcast %cst_22 : f32 to vector<128x128xf32>
    %37 = arith.select %5, %35, %36 : vector<128x128xi1>, vector<128x128xf32>
    %cst_23 = arith.constant dense<0.000000e+00> : vector<128xf32>
    %38 = vector.multi_reduction <add>, %37, %cst_23 [1] : vector<128x128xf32> to vector<128xf32>
    %39 = vector.shape_cast %38 : vector<128xf32> to vector<128x1xf32>
    %cst_24 = arith.constant 0.000000e+00 : f32
    %40 = vector.broadcast %cst_24 : f32 to vector<128x1xf32>
    %41 = arith.cmpf ogt, %39, %40 : vector<128x1xf32>
    %cst_25 = arith.constant 1.000000e+00 : f32
    %42 = vector.broadcast %cst_25 : f32 to vector<128x1xf32>
    %43 = arith.select %41, %39, %42 : vector<128x1xi1>, vector<128x1xf32>
    %44 = tpu.reciprocal %43 {approx = true} : vector<128x1xf32> -> vector<128x1xf32>
    %45 = vector.broadcast %44 : vector<128x1xf32> to vector<128x128xf32>
    %46 = arith.mulf %37, %45 : vector<128x128xf32>
    %47 = arith.truncf %46 : vector<128x128xf32> to vector<128x128xbf16>
    %48 = arith.truncf %23 : vector<128x32xf32> to vector<128x32xbf16>
    %cst_26 = arith.constant dense<0.000000e+00> : vector<128x32xf32>
    %49 = tpu.matmul %47, %48, %cst_26 {dimension_numbers = #tpu.dot_dimension_numbers<[1], [0], [0], [1], [0, 0, 1, 1], [], []>} : vector<128x128xbf16>, vector<128x32xbf16>, vector<128x32xf32> -> vector<128x32xf32>
    %50 = arith.addf %17, %49 : vector<128x32xf32>
    %51 = arith.addf %50, %16 : vector<128x32xf32>
    %52 = math.tanh %51 : vector<128x32xf32>
    %cst_27 = arith.constant 1.000000e-01 : f32
    %53 = vector.broadcast %cst_27 : f32 to vector<128x32xf32>
    %54 = arith.mulf %53, %52 : vector<128x32xf32>
    %55 = arith.addf %10, %54 : vector<128x32xf32>
    %56 = arith.truncf %55 : vector<128x32xf32> to vector<128x32xbf16>
    %cst_28 = arith.constant dense<0.000000e+00> : vector<128x96xf32>
    %57 = tpu.matmul %56, %6, %cst_28 {dimension_numbers = #tpu.dot_dimension_numbers<[1], [0], [0], [1], [0, 0, 1, 1], [], []>} : vector<128x32xbf16>, vector<32x96xbf16>, vector<128x96xf32> -> vector<128x96xf32>
    %58 = vector.broadcast %8 : vector<1x96xf32> to vector<128x96xf32>
    %59 = arith.addf %57, %58 : vector<128x96xf32>
    %60 = vector.extract_strided_slice %59 {offsets = [0, 0], sizes = [128, 32], strides = [1, 1]} : vector<128x96xf32> to vector<128x32xf32>
    %61 = vector.extract_strided_slice %59 {offsets = [0, 32], sizes = [128, 32], strides = [1, 1]} : vector<128x96xf32> to vector<128x32xf32>
    %62 = vector.extract_strided_slice %59 {offsets = [0, 64], sizes = [128, 32], strides = [1, 1]} : vector<128x96xf32> to vector<128x32xf32>
    %cst_29 = arith.constant dense<0.000000e+00> : vector<128x32xf32>
    %63 = tpu.matmul %1, %56, %cst_29 {dimension_numbers = #tpu.dot_dimension_numbers<[1], [0], [0], [1], [0, 0, 1, 1], [], []>} : vector<128x128xbf16>, vector<128x32xbf16>, vector<128x32xf32> -> vector<128x32xf32>
    %64 = arith.truncf %63 : vector<128x32xf32> to vector<128x32xbf16>
    %cst_30 = arith.constant dense<0.000000e+00> : vector<128x64xf32>
    %65 = tpu.matmul %64, %7, %cst_30 {dimension_numbers = #tpu.dot_dimension_numbers<[1], [0], [0], [1], [0, 0, 1, 1], [], []>} : vector<128x32xbf16>, vector<32x64xbf16>, vector<128x64xf32> -> vector<128x64xf32>
    %66 = arith.addf %65, %9 : vector<128x64xf32>
    %67 = vector.extract_strided_slice %66 {offsets = [0, 0], sizes = [128, 32], strides = [1, 1]} : vector<128x64xf32> to vector<128x32xf32>
    %68 = vector.extract_strided_slice %66 {offsets = [0, 32], sizes = [128, 32], strides = [1, 1]} : vector<128x64xf32> to vector<128x32xf32>
    %69 = arith.truncf %60 : vector<128x32xf32> to vector<128x32xbf16>
    %70 = arith.truncf %67 : vector<128x32xf32> to vector<128x32xbf16>
    %cst_31 = arith.constant dense<0.000000e+00> : vector<128x128xf32>
    %71 = tpu.matmul %69, %70, %cst_31 {dimension_numbers = #tpu.dot_dimension_numbers<[1], [1], [0], [0], [0, 0, 1, 0], [], []>} : vector<128x32xbf16>, vector<128x32xbf16>, vector<128x128xf32> -> vector<128x128xf32>
    %cst_32 = arith.constant 0.176776692 : f32
    %72 = vector.broadcast %cst_32 : f32 to vector<128x128xf32>
    %73 = arith.mulf %71, %72 : vector<128x128xf32>
    %cst_33 = arith.constant -1.000000e+30 : f32
    %74 = vector.broadcast %cst_33 : f32 to vector<128x128xf32>
    %75 = arith.select %5, %73, %74 : vector<128x128xi1>, vector<128x128xf32>
    %cst_34 = arith.constant dense<0xFF800000> : vector<128xf32>
    %76 = vector.multi_reduction <maximumf>, %75, %cst_34 [1] : vector<128x128xf32> to vector<128xf32>
    %77 = vector.shape_cast %76 : vector<128xf32> to vector<128x1xf32>
    %78 = vector.broadcast %77 : vector<128x1xf32> to vector<128x128xf32>
    %79 = arith.subf %75, %78 : vector<128x128xf32>
    %80 = math.exp %79 : vector<128x128xf32>
    %cst_35 = arith.constant 0.000000e+00 : f32
    %81 = vector.broadcast %cst_35 : f32 to vector<128x128xf32>
    %82 = arith.select %5, %80, %81 : vector<128x128xi1>, vector<128x128xf32>
    %cst_36 = arith.constant dense<0.000000e+00> : vector<128xf32>
    %83 = vector.multi_reduction <add>, %82, %cst_36 [1] : vector<128x128xf32> to vector<128xf32>
    %84 = vector.shape_cast %83 : vector<128xf32> to vector<128x1xf32>
    %cst_37 = arith.constant 0.000000e+00 : f32
    %85 = vector.broadcast %cst_37 : f32 to vector<128x1xf32>
    %86 = arith.cmpf ogt, %84, %85 : vector<128x1xf32>
    %cst_38 = arith.constant 1.000000e+00 : f32
    %87 = vector.broadcast %cst_38 : f32 to vector<128x1xf32>
    %88 = arith.select %86, %84, %87 : vector<128x1xi1>, vector<128x1xf32>
    %89 = tpu.reciprocal %88 {approx = true} : vector<128x1xf32> -> vector<128x1xf32>
    %90 = vector.broadcast %89 : vector<128x1xf32> to vector<128x128xf32>
    %91 = arith.mulf %82, %90 : vector<128x128xf32>
    %92 = arith.truncf %91 : vector<128x128xf32> to vector<128x128xbf16>
    %93 = arith.truncf %68 : vector<128x32xf32> to vector<128x32xbf16>
    %cst_39 = arith.constant dense<0.000000e+00> : vector<128x32xf32>
    %94 = tpu.matmul %92, %93, %cst_39 {dimension_numbers = #tpu.dot_dimension_numbers<[1], [0], [0], [1], [0, 0, 1, 1], [], []>} : vector<128x128xbf16>, vector<128x32xbf16>, vector<128x32xf32> -> vector<128x32xf32>
    %95 = arith.addf %62, %94 : vector<128x32xf32>
    %96 = arith.addf %95, %61 : vector<128x32xf32>
    %97 = math.tanh %96 : vector<128x32xf32>
    %cst_40 = arith.constant 1.000000e-01 : f32
    %98 = vector.broadcast %cst_40 : f32 to vector<128x32xf32>
    %99 = arith.mulf %98, %97 : vector<128x32xf32>
    %100 = arith.addf %55, %99 : vector<128x32xf32>
    %c0_41 = arith.constant 0 : index
    %c0_42 = arith.constant 0 : index
    %101 = vector.load %arg8[%c0_41, %c0_42] : memref<128x32xf32, #tpu.memory_space<vmem>>, vector<128x32xf32>
    tpu.vector_store %arg8[%c0_41, %c0_42], %100 {strides = array<i32>} : memref<128x32xf32, #tpu.memory_space<vmem>>, vector<128x32xf32>,
    return
  }
  func.func @transform_0(%arg0: i32) -> (i32, i32) {
    %c0_i32 = arith.constant 0 : i32
    %c0_i32_0 = arith.constant 0 : i32
    return %arg0, %c0_i32 : i32, i32
  }
  func.func @transform_1(%arg0: i32) -> (i32, i32) {
    %c0_i32 = arith.constant 0 : i32
    %c0_i32_0 = arith.constant 0 : i32
    return %arg0, %c0_i32 : i32, i32
  }
  func.func @transform_2(%arg0: i32) -> (i32, i32, i32) {
    %c0_i32 = arith.constant 0 : i32
    %c0_i32_0 = arith.constant 0 : i32
    %c0_i32_1 = arith.constant 0 : i32
    return %arg0, %c0_i32, %c0_i32_0 : i32, i32, i32
  }
  func.func @transform_3(%arg0: i32) -> (i32, i32, i32) {
    %c0_i32 = arith.constant 0 : i32
    %c0_i32_0 = arith.constant 0 : i32
    %c0_i32_1 = arith.constant 0 : i32
    return %arg0, %c0_i32, %c0_i32_0 : i32, i32, i32
  }
  func.func @transform_4(%arg0: i32) -> (i32, i32) {
    %c0_i32 = arith.constant 0 : i32
    %c0_i32_0 = arith.constant 0 : i32
    %c0_i32_1 = arith.constant 0 : i32
    return %c0_i32, %c0_i32_0 : i32, i32
  }
  func.func @transform_5(%arg0: i32) -> (i32, i32) {
    %c0_i32 = arith.constant 0 : i32
    %c0_i32_0 = arith.constant 0 : i32
    %c0_i32_1 = arith.constant 0 : i32
    return %c0_i32, %c0_i32_0 : i32, i32
  }
  func.func @transform_6(%arg0: i32) -> (i32, i32) {
    %c0_i32 = arith.constant 0 : i32
    %c0_i32_0 = arith.constant 0 : i32
    %c0_i32_1 = arith.constant 0 : i32
    return %c0_i32, %c0_i32_0 : i32, i32
  }
  func.func @transform_7(%arg0: i32) -> (i32, i32) {
    %c0_i32 = arith.constant 0 : i32
    %c0_i32_0 = arith.constant 0 : i32
    return %arg0, %c0_i32 : i32, i32
  }
}

</mosaic_0001>

<llo_original>
// kernel: tpu_custom_call.1
$region0: #{tpu_custom_call.1}
  #allocation0 [shape = 'u32[]', space=smem, size = 0x4, offset = 0x4, fixed_abs, tag = 'smem constant byte address 0x4 - core index']
  #allocation1 [shape = 'u32[72,128]{1,0:T(1,128)}', space=vmem, size = 0x9000, scoped, tag = 'internal scratch']
  %s0 = inlined_call_operand.vmem [shape: f32[256,32], index: 0, kind: input, shape index: {}]
  %s1 = inlined_call_operand.vmem [shape: f32[256,64], index: 1, kind: input, shape index: {}]
  %s2 = inlined_call_operand.vmem [shape: bf16[2,128,128], index: 2, kind: input, shape index: {}]
  %s3 = inlined_call_operand.vmem [shape: bf16[2,128,128], index: 3, kind: input, shape index: {}]
  %s4 = inlined_call_operand.vmem [shape: bf16[32,96], index: 4, kind: input, shape index: {}]
  %s5 = inlined_call_operand.vmem [shape: f32[1,96], index: 5, kind: input, shape index: {}]
  %s6 = inlined_call_operand.vmem [shape: bf16[32,64], index: 6, kind: input, shape index: {}]
  %s7 = inlined_call_operand.vmem [shape: f32[256,32], index: 7, kind: output, shape index: {}]
  %s8 = sld [smem:[#allocation0]]
  $region61: #{tpu_custom_call.1} parent=0
    _
  %s10 = ssub.s32 1, %s8
  %s11 = scalar_select 0, %s10, %s8
  loop: start=0, step=1, limit=4
  $region2: #{tpu_custom_call.1} parent=0 // loop_pre_header
    _
  $region3: #{tpu_custom_call.1} parent=0 // loop_header
    %s13 = sphi 0, %s17
    %p14 = scmp.ge.s32.totalorder %s13, 4
    %s23 = sphi 0, %s25
    %s26 = sphi 0, %s23
    %s27 = sphi 0, %s26
    %s43 = sphi 0, %s27
    %s49 = sphi 0, %s51
    %s52 = sphi 0, %s49
    %s53 = sphi 0, %s52
    %s69 = sphi 0, %s53
    %s75 = sphi 0, %s77
    %s78 = sphi 0, %s75
    %s79 = sphi 0, %s78
    %s95 = sphi 0, %s79
    %s101 = sphi 0, %s103
    %s104 = sphi 0, %s101
    %s105 = sphi 0, %s104
    %s121 = sphi 0, %s105
    %s125 = sphi 0, %s125
    %s127 = sphi 0, %s125
    %s128 = sphi 0, %s127
    %s142 = sphi 0, %s128
    %s146 = sphi 0, %s146
    %s148 = sphi 0, %s146
    %s149 = sphi 0, %s148
    %s163 = sphi 0, %s149
    %s167 = sphi 0, %s167
    %s169 = sphi 0, %s167
    %s170 = sphi 0, %s169
    %s184 = sphi 0, %s170
    %s190 = sphi 0, %s192
    %s193 = sphi 0, %s190
    %s194 = sphi 0, %s193
    %s210 = sphi 0, %s194
  $region4: #{tpu_custom_call.1} parent=0 // loop_header_branch
    %16 = sbr.rel (%p14) target = $region8
  $region5: #{tpu_custom_call.1} parent=0 // loop_body
    %s18 = ssub.s32 %s13, 1
    %s19 = ssub.s32 %s13, 2
    %s20 = sadd.s32 %s13, 1
    %s21 = ssub.s32 %s13, %s20
    %p22 = scmp.eq.s32.totalorder %s21, 0
    %s24 = sadd.s32 %s23, 1
    %s25 = scalar_select %p22, %s23, %s24
    %p28 = pneg %p22
    %p29 = scmp.eq.s32.totalorder %s13, 1
    %p30 = por %p28, %p29
    %p31 = scmp.ne.s32.totalorder %s23, %s26
    %p32 = scmp.eq.s32.totalorder %s13, 0
    %p33 = por %p31, %p32
    %p34 = scmp.ne.s32.totalorder %s23, %s26
    %p35 = scmp.eq.s32.totalorder %s18, 1
    %p36 = por %p34, %p35
    %p37 = scmp.ne.s32.totalorder %s26, %s27
    %p38 = scmp.eq.s32.totalorder %s18, 0
    %p39 = por %p37, %p38
    %p40 = scmp.ne.s32.totalorder %s26, %s27
    %p41 = scmp.eq.s32.totalorder %s19, 1
    %p42 = por %p40, %p41
    %p44 = scmp.ne.s32.totalorder %s27, %s43
    %p45 = scmp.eq.s32.totalorder %s19, 0
    %p46 = por %p44, %p45
    %s47 = ssub.s32 %s13, %s20
    %p48 = scmp.eq.s32.totalorder %s47, 0
    %s50 = sadd.s32 %s49, 1
    %s51 = scalar_select %p48, %s49, %s50
    %p54 = pneg %p48
    %p55 = scmp.eq.s32.totalorder %s13, 1
    %p56 = por %p54, %p55
    %p57 = scmp.ne.s32.totalorder %s49, %s52
    %p58 = scmp.eq.s32.totalorder %s13, 0
    %p59 = por %p57, %p58
    %p60 = scmp.ne.s32.totalorder %s49, %s52
    %p61 = scmp.eq.s32.totalorder %s18, 1
    %p62 = por %p60, %p61
    %p63 = scmp.ne.s32.totalorder %s52, %s53
    %p64 = scmp.eq.s32.totalorder %s18, 0
    %p65 = por %p63, %p64
    %p66 = scmp.ne.s32.totalorder %s52, %s53
    %p67 = scmp.eq.s32.totalorder %s19, 1
    %p68 = por %p66, %p67
    %p70 = scmp.ne.s32.totalorder %s53, %s69
    %p71 = scmp.eq.s32.totalorder %s19, 0
    %p72 = por %p70, %p71
    %s73 = ssub.s32 %s13, %s20
    %p74 = scmp.eq.s32.totalorder %s73, 0
    %s76 = sadd.s32 %s75, 1
    %s77 = scalar_select %p74, %s75, %s76
    %p80 = pneg %p74
    %p81 = scmp.eq.s32.totalorder %s13, 1
    %p82 = por %p80, %p81
    %p83 = scmp.ne.s32.totalorder %s75, %s78
    %p84 = scmp.eq.s32.totalorder %s13, 0
    %p85 = por %p83, %p84
    %p86 = scmp.ne.s32.totalorder %s75, %s78
    %p87 = scmp.eq.s32.totalorder %s18, 1
    %p88 = por %p86, %p87
    %p89 = scmp.ne.s32.totalorder %s78, %s79
    %p90 = scmp.eq.s32.totalorder %s18, 0
    %p91 = por %p89, %p90
    %p92 = scmp.ne.s32.totalorder %s78, %s79
    %p93 = scmp.eq.s32.totalorder %s19, 1
    %p94 = por %p92, %p93
    %p96 = scmp.ne.s32.totalorder %s79, %s95
    %p97 = scmp.eq.s32.totalorder %s19, 0
    %p98 = por %p96, %p97
    %s99 = ssub.s32 %s13, %s20
    %p100 = scmp.eq.s32.totalorder %s99, 0
    %s102 = sadd.s32 %s101, 1
    %s103 = scalar_select %p100, %s101, %s102
    %p106 = pneg %p100
    %p107 = scmp.eq.s32.totalorder %s13, 1
    %p108 = por %p106, %p107
    %p109 = scmp.ne.s32.totalorder %s101, %s104
    %p110 = scmp.eq.s32.totalorder %s13, 0
    %p111 = por %p109, %p110
    %p112 = scmp.ne.s32.totalorder %s101, %s104
    %p113 = scmp.eq.s32.totalorder %s18, 1
    %p114 = por %p112, %p113
    %p115 = scmp.ne.s32.totalorder %s104, %s105
    %p116 = scmp.eq.s32.totalorder %s18, 0
    %p117 = por %p115, %p116
    %p118 = scmp.ne.s32.totalorder %s104, %s105
    %p119 = scmp.eq.s32.totalorder %s19, 1
    %p120 = por %p118, %p119
    %p122 = scmp.ne.s32.totalorder %s105, %s121
    %p123 = scmp.eq.s32.totalorder %s19, 0
    %p124 = por %p122, %p123
    %s126 = sadd.s32 %s125, 1
    %p129 = scmp.eq.s32.totalorder %s13, 1
    %p130 = scmp.ne.s32.totalorder %s125, %s127
    %p131 = scmp.eq.s32.totalorder %s13, 0
    %p132 = por %p130, %p131
    %p133 = scmp.ne.s32.totalorder %s125, %s127
    %p134 = scmp.eq.s32.totalorder %s18, 1
    %p135 = por %p133, %p134
    %p136 = scmp.ne.s32.totalorder %s127, %s128
    %p137 = scmp.eq.s32.totalorder %s18, 0
    %p138 = por %p136, %p137
    %p139 = scmp.ne.s32.totalorder %s127, %s128
    %p140 = scmp.eq.s32.totalorder %s19, 1
    %p141 = por %p139, %p140
    %p143 = scmp.ne.s32.totalorder %s128, %s142
    %p144 = scmp.eq.s32.totalorder %s19, 0
    %p145 = por %p143, %p144
    %s147 = sadd.s32 %s146, 1
    %p150 = scmp.eq.s32.totalorder %s13, 1
    %p151 = scmp.ne.s32.totalorder %s146, %s148
    %p152 = scmp.eq.s32.totalorder %s13, 0
    %p153 = por %p151, %p152
    %p154 = scmp.ne.s32.totalorder %s146, %s148
    %p155 = scmp.eq.s32.totalorder %s18, 1
    %p156 = por %p154, %p155
    %p157 = scmp.ne.s32.totalorder %s148, %s149
    %p158 = scmp.eq.s32.totalorder %s18, 0
    %p159 = por %p157, %p158
    %p160 = scmp.ne.s32.totalorder %s148, %s149
    %p161 = scmp.eq.s32.totalorder %s19, 1
    %p162 = por %p160, %p161
    %p164 = scmp.ne.s32.totalorder %s149, %s163
    %p165 = scmp.eq.s32.totalorder %s19, 0
    %p166 = por %p164, %p165
    %s168 = sadd.s32 %s167, 1
    %p171 = scmp.eq.s32.totalorder %s13, 1
    %p172 = scmp.ne.s32.totalorder %s167, %s169
    %p173 = scmp.eq.s32.totalorder %s13, 0
    %p174 = por %p172, %p173
    %p175 = scmp.ne.s32.totalorder %s167, %s169
    %p176 = scmp.eq.s32.totalorder %s18, 1
    %p177 = por %p175, %p176
    %p178 = scmp.ne.s32.totalorder %s169, %s170
    %p179 = scmp.eq.s32.totalorder %s18, 0
    %p180 = por %p178, %p179
    %p181 = scmp.ne.s32.totalorder %s169, %s170
    %p182 = scmp.eq.s32.totalorder %s19, 1
    %p183 = por %p181, %p182
    %p185 = scmp.ne.s32.totalorder %s170, %s184
    %p186 = scmp.eq.s32.totalorder %s19, 0
    %p187 = por %p185, %p186
    %s188 = ssub.s32 %s13, %s20
    %p189 = scmp.eq.s32.totalorder %s188, 0
    %s191 = sadd.s32 %s190, 1
    %s192 = scalar_select %p189, %s190, %s191
    %p195 = pneg %p189
    %p196 = scmp.eq.s32.totalorder %s13, 1
    %p197 = por %p195, %p196
    %p198 = scmp.ne.s32.totalorder %s190, %s193
    %p199 = scmp.eq.s32.totalorder %s13, 0
    %p200 = por %p198, %p199
    %p201 = scmp.ne.s32.totalorder %s190, %s193
    %p202 = scmp.eq.s32.totalorder %s18, 1
    %p203 = por %p201, %p202
    %p204 = scmp.ne.s32.totalorder %s193, %s194
    %p205 = scmp.eq.s32.totalorder %s18, 0
    %p206 = por %p204, %p205
    %p207 = scmp.ne.s32.totalorder %s193, %s194
    %p208 = scmp.eq.s32.totalorder %s19, 1
    %p209 = por %p207, %p208
    %p211 = scmp.ne.s32.totalorder %s194, %s210
    %p212 = scmp.eq.s32.totalorder %s19, 0
    %p213 = por %p211, %p212
    %p214 = scmp.le.s32.totalorder 1, %s13
    %p215 = scmp.lt.s32.totalorder %s13, 3
    %p216 = pnand %p214, %p215
    %p217 = pneg %p216
    // Predicated region
    $region9: #{tpu_custom_call.1} parent=5 // pred_check
      _
    $region10: #{tpu_custom_call.1} parent=5 // pred_check_branch
      %219 = sbr.rel (%p216) target = $region12
    $region11: #{tpu_custom_call.1} parent=5 // pred_region
      %s220 = ssub.s32 %s13, 1
      // Predicated region
      $region13: #{tpu_custom_call.1} parent=11 // pred_check
        %p221 = pneg %p138
      $region14: #{tpu_custom_call.1} parent=11 // pred_check_branch
        %223 = sbr.rel (%p221) target = $region16
      $region15: #{tpu_custom_call.1} parent=11 // pred_region
        _
      $region16: #{tpu_custom_call.1} parent=11 // pred_fallthru
        _
      // Predicated region
      $region17: #{tpu_custom_call.1} parent=11 // pred_check
        %p224 = pneg %p159
      $region18: #{tpu_custom_call.1} parent=11 // pred_check_branch
        %226 = sbr.rel (%p224) target = $region20
      $region19: #{tpu_custom_call.1} parent=11 // pred_region
        _
      $region20: #{tpu_custom_call.1} parent=11 // pred_fallthru
        _
      // Predicated region
      $region21: #{tpu_custom_call.1} parent=11 // pred_check
        %p227 = pneg %p180
      $region22: #{tpu_custom_call.1} parent=11 // pred_check_branch
        %229 = sbr.rel (%p227) target = $region24
      $region23: #{tpu_custom_call.1} parent=11 // pred_region
        _
      $region24: #{tpu_custom_call.1} parent=11 // pred_fallthru
        _
    $region12: #{tpu_custom_call.1} parent=5 // pred_fallthru
      _
    %p230 = scmp.lt.s32.totalorder %s13, 2
    // Predicated region
    $region25: #{tpu_custom_call.1} parent=5 // pred_check
      %p231 = pneg %p230
    $region26: #{tpu_custom_call.1} parent=5 // pred_check_branch
      %233 = sbr.rel (%p231) target = $region28
    $region27: #{tpu_custom_call.1} parent=5 // pred_region
      // Predicated region
      $region29: #{tpu_custom_call.1} parent=27 // pred_check
        %p234 = pneg %p33
      $region30: #{tpu_custom_call.1} parent=27 // pred_check_branch
        %236 = sbr.rel (%p234) target = $region32
      $region31: #{tpu_custom_call.1} parent=27 // pred_region
        %s237 = smul.u32 16, %s13
        %p238 = scmp.lt.s32.totalorder %s237, 31
        %s239 = scalar_select %p238, %s237, 31
        %s240 = smul.addr %s239, 8
        %s241 = scalar_lea.vmem %s0, %s240
        %s242 = smul.u32 16, %s13
      $region32: #{tpu_custom_call.1} parent=27 // pred_fallthru
        _
      // Predicated region
      $region33: #{tpu_custom_call.1} parent=27 // pred_check
        %p243 = pneg %p59
      $region34: #{tpu_custom_call.1} parent=27 // pred_check_branch
        %245 = sbr.rel (%p243) target = $region36
      $region35: #{tpu_custom_call.1} parent=27 // pred_region
        %s246 = smul.u32 16, %s13
        %p247 = scmp.lt.s32.totalorder %s246, 31
        %s248 = scalar_select %p247, %s246, 31
        %s249 = smul.addr %s248, 8
        %s250 = scalar_lea.vmem %s1, %s249
        %s251 = smul.u32 16, %s13
      $region36: #{tpu_custom_call.1} parent=27 // pred_fallthru
        _
      // Predicated region
      $region37: #{tpu_custom_call.1} parent=27 // pred_check
        %p252 = pneg %p85
      $region38: #{tpu_custom_call.1} parent=27 // pred_check_branch
        %254 = sbr.rel (%p252) target = $region40
      $region39: #{tpu_custom_call.1} parent=27 // pred_region
        %p255 = scmp.lt.s32.totalorder %s13, 1
        %s256 = scalar_select %p255, %s13, 1
        %s257 = smul.addr %s256, 16
        %s258 = smul.addr %s257, 4
        %s259 = scalar_lea.vmem %s2, %s258
      $region40: #{tpu_custom_call.1} parent=27 // pred_fallthru
        _
      // Predicated region
      $region41: #{tpu_custom_call.1} parent=27 // pred_check
        %p260 = pneg %p111
      $region42: #{tpu_custom_call.1} parent=27 // pred_check_branch
        %262 = sbr.rel (%p260) target = $region44
      $region43: #{tpu_custom_call.1} parent=27 // pred_region
        %p263 = scmp.lt.s32.totalorder %s13, 1
        %s264 = scalar_select %p263, %s13, 1
        %s265 = smul.addr %s264, 16
        %s266 = smul.addr %s265, 4
        %s267 = scalar_lea.vmem %s3, %s266
      $region44: #{tpu_custom_call.1} parent=27 // pred_fallthru
        _
    $region28: #{tpu_custom_call.1} parent=5 // pred_fallthru
      _
    %p268 = scmp.le.s32.totalorder 1, %s13
    %p269 = scmp.lt.s32.totalorder %s13, 3
    %p270 = pnand %p268, %p269
    %p271 = pneg %p270
    // Predicated region
    $region45: #{tpu_custom_call.1} parent=5 // pred_check
      _
    $region46: #{tpu_custom_call.1} parent=5 // pred_check_branch
      %273 = sbr.rel (%p270) target = $region48
    $region47: #{tpu_custom_call.1} parent=5 // pred_region
      %s274 = ssub.s32 %s13, 1
      %s275 = smul.u32 16, %s18
      %p276 = scmp.lt.s32.totalorder %s275, 31
      %s277 = scalar_select %p276, %s275, 31
      %s278 = smul.addr %s277, 8
      %s279 = scalar_lea.vmem %s0, %s278
      %p280 = pneg %p39
      %p281 = pneg %p36
      %s282 = smul.u32 16, %s18
      %p283 = scmp.lt.s32.totalorder %s282, 31
      %s284 = scalar_select %p283, %s282, 31
      %s285 = smul.addr %s284, 8
      %s286 = scalar_lea.vmem %s1, %s285
      %p287 = pneg %p65
      %p288 = pneg %p62
      %p289 = scmp.lt.s32.totalorder %s18, 1
      %s290 = scalar_select %p289, %s18, 1
      %s291 = smul.addr %s290, 16
      %s292 = smul.addr %s291, 4
      %s293 = scalar_lea.vmem %s2, %s292
      %p294 = pneg %p91
      %p295 = pneg %p88
      %p296 = scmp.lt.s32.totalorder %s18, 1
      %s297 = scalar_select %p296, %s18, 1
      %s298 = smul.addr %s297, 16
      %s299 = smul.addr %s298, 4
      %s300 = scalar_lea.vmem %s3, %s299
      %p301 = pneg %p117
      %p302 = pneg %p114
      %p303 = pneg %p138
      %p304 = pneg %p135
      %p305 = pneg %p159
      %p306 = pneg %p156
      %p307 = pneg %p180
      %p308 = pneg %p177
      %p309 = pneg %p206
      %p310 = pneg %p203
      %s311 = smul.u32 16, %s18
      %p312 = scmp.lt.s32.totalorder %s311, 31
      %s313 = scalar_select %p312, %s311, 31
      %s314 = smul.addr %s313, 8
      %s315 = scalar_lea.vmem %s7, %s314
      %s316 = smul.u32 16, %s18
      %p317 = scmp.lt.s32.totalorder %s316, 31
      %s318 = scalar_select %p317, %s316, 31
      %s319 = smul.addr %s318, 8
      %s320 = scalar_lea.vmem %s0, %s319
      %s321 = smul.u32 16, %s18
      %s322 = smul.u32 16, %s18
      %p323 = scmp.lt.s32.totalorder %s322, 31
      %s324 = scalar_select %p323, %s322, 31
      %s325 = smul.addr %s324, 8
      %s326 = scalar_lea.vmem %s1, %s325
      %s327 = smul.u32 16, %s18
      %p328 = scmp.lt.s32.totalorder %s18, 1
      %s329 = scalar_select %p328, %s18, 1
      %s330 = smul.addr %s329, 16
      %s331 = smul.addr %s330, 4
      %s332 = scalar_lea.vmem %s2, %s331
      %p333 = scmp.lt.s32.totalorder %s18, 1
      %s334 = scalar_select %p333, %s18, 1
      %s335 = smul.addr %s334, 16
      %s336 = smul.addr %s335, 4
      %s337 = scalar_lea.vmem %s3, %s336
      %s338 = smul.u32 16, %s18
      %p339 = scmp.lt.s32.totalorder %s338, 31
      %s340 = scalar_select %p339, %s338, 31
      %s341 = smul.addr %s340, 8
      %s342 = scalar_lea.vmem %s7, %s341
      %s343 = smul.u32 16, %s18
      %v345 = vld [vmem:[%s332] sm:$0xf]
      %v346 = vld [vmem:[%s332 + $0x4] sm:$0xf]
      %v347 = vld [vmem:[%s332 + $0x8] sm:$0xf]
      %v348 = vld [vmem:[%s332 + $0xc] sm:$0xf]
      %v349 = vld [vmem:[%s332 + $0x10] sm:$0xf]
      %v350 = vld [vmem:[%s332 + $0x14] sm:$0xf]
      %v351 = vld [vmem:[%s332 + $0x18] sm:$0xf]
      %v352 = vld [vmem:[%s332 + $0x1c] sm:$0xf]
      %v353 = vld [vmem:[%s332 + $0x20] sm:$0xf]
      %v354 = vld [vmem:[%s332 + $0x24] sm:$0xf]
      %v355 = vld [vmem:[%s332 + $0x28] sm:$0xf]
      %v356 = vld [vmem:[%s332 + $0x2c] sm:$0xf]
      %v357 = vld [vmem:[%s332 + $0x30] sm:$0xf]
      %v358 = vld [vmem:[%s332 + $0x34] sm:$0xf]
      %v359 = vld [vmem:[%s332 + $0x38] sm:$0xf]
      %v360 = vld [vmem:[%s332 + $0x3c] sm:$0xf]
      %v361 = vld [vmem:[%s337] sm:$0xf]
      %v362 = vld [vmem:[%s337 + $0x4] sm:$0xf]
      %v363 = vld [vmem:[%s337 + $0x8] sm:$0xf]
      %v364 = vld [vmem:[%s337 + $0xc] sm:$0xf]
      %v365 = vld [vmem:[%s337 + $0x10] sm:$0xf]
      %v366 = vld [vmem:[%s337 + $0x14] sm:$0xf]
      %v367 = vld [vmem:[%s337 + $0x18] sm:$0xf]
      %v368 = vld [vmem:[%s337 + $0x1c] sm:$0xf]
      %v369 = vld [vmem:[%s337 + $0x20] sm:$0xf]
      %v370 = vld [vmem:[%s337 + $0x24] sm:$0xf]
      %v371 = vld [vmem:[%s337 + $0x28] sm:$0xf]
      %v372 = vld [vmem:[%s337 + $0x2c] sm:$0xf]
      %v373 = vld [vmem:[%s337 + $0x30] sm:$0xf]
      %v374 = vld [vmem:[%s337 + $0x34] sm:$0xf]
      %v375 = vld [vmem:[%s337 + $0x38] sm:$0xf]
      %v376 = vld [vmem:[%s337 + $0x3c] sm:$0xf]
      %v377 = vunpack.c.l.bf16 %v361
      %v378 = vunpack.c.l.bf16 %v362
      %v379 = vunpack.c.l.bf16 %v363
      %v380 = vunpack.c.l.bf16 %v364
      %v381 = vunpack.c.l.bf16 %v365
      %v382 = vunpack.c.l.bf16 %v366
      %v383 = vunpack.c.l.bf16 %v367
      %v384 = vunpack.c.l.bf16 %v368
      %v385 = vunpack.c.l.bf16 %v369
      %v386 = vunpack.c.l.bf16 %v370
      %v387 = vunpack.c.l.bf16 %v371
      %v388 = vunpack.c.l.bf16 %v372
      %v389 = vunpack.c.l.bf16 %v373
      %v390 = vunpack.c.l.bf16 %v374
      %v391 = vunpack.c.l.bf16 %v375
      %v392 = vunpack.c.l.bf16 %v376
      %vm393 = vcmp.gt.f32.partialorder %v377, 0.0
      %vm394 = vcmp.gt.f32.partialorder %v378, 0.0
      %vm395 = vcmp.gt.f32.partialorder %v379, 0.0
      %vm396 = vcmp.gt.f32.partialorder %v380, 0.0
      %vm397 = vcmp.gt.f32.partialorder %v381, 0.0
      %vm398 = vcmp.gt.f32.partialorder %v382, 0.0
      %vm399 = vcmp.gt.f32.partialorder %v383, 0.0
      %vm400 = vcmp.gt.f32.partialorder %v384, 0.0
      %vm401 = vcmp.gt.f32.partialorder %v385, 0.0
      %vm402 = vcmp.gt.f32.partialorder %v386, 0.0
      %vm403 = vcmp.gt.f32.partialorder %v387, 0.0
      %vm404 = vcmp.gt.f32.partialorder %v388, 0.0
      %vm405 = vcmp.gt.f32.partialorder %v389, 0.0
      %vm406 = vcmp.gt.f32.partialorder %v390, 0.0
      %vm407 = vcmp.gt.f32.partialorder %v391, 0.0
      %vm408 = vcmp.gt.f32.partialorder %v392, 0.0
      %v409 = vld [vmem:[%s4] sm:$0xf]
      %v410 = vld [vmem:[%s4 + $0x4] sm:$0xf]
      %v411 = vld [vmem:[%s4 + $0x8] sm:$0xf]
      %v412 = vld [vmem:[%s4 + $0xc] sm:$0xf]
      %v413 = vld [vmem:[%s6] sm:$0xf]
      %v414 = vld [vmem:[%s6 + $0x4] sm:$0xf]
      %v415 = vld [vmem:[%s6 + $0x8] sm:$0xf]
      %v416 = vld [vmem:[%s6 + $0xc] sm:$0xf]
      %v417 = vld [vmem:[%s5] sm:$0x1]
      %v418 = vld [vmem:[%s326] sm:$0xff]
      %v419 = vld [vmem:[%s326 + $0x8] sm:$0xff]
      %v420 = vld [vmem:[%s326 + $0x10] sm:$0xff]
      %v421 = vld [vmem:[%s326 + $0x18] sm:$0xff]
      %v422 = vld [vmem:[%s326 + $0x20] sm:$0xff]
      %v423 = vld [vmem:[%s326 + $0x28] sm:$0xff]
      %v424 = vld [vmem:[%s326 + $0x30] sm:$0xff]
      %v425 = vld [vmem:[%s326 + $0x38] sm:$0xff]
      %v426 = vld [vmem:[%s326 + $0x40] sm:$0xff]
      %v427 = vld [vmem:[%s326 + $0x48] sm:$0xff]
      %v428 = vld [vmem:[%s326 + $0x50] sm:$0xff]
      %v429 = vld [vmem:[%s326 + $0x58] sm:$0xff]
      %v430 = vld [vmem:[%s326 + $0x60] sm:$0xff]
      %v431 = vld [vmem:[%s326 + $0x68] sm:$0xff]
      %v432 = vld [vmem:[%s326 + $0x70] sm:$0xff]
      %v433 = vld [vmem:[%s326 + $0x78] sm:$0xff]
      %v434 = vld [vmem:[%s320] sm:$0xff]
      %v435 = vld [vmem:[%s320 + $0x8] sm:$0xff]
      %v436 = vld [vmem:[%s320 + $0x10] sm:$0xff]
      %v437 = vld [vmem:[%s320 + $0x18] sm:$0xff]
      %v438 = vld [vmem:[%s320 + $0x20] sm:$0xff]
      %v439 = vld [vmem:[%s320 + $0x28] sm:$0xff]
      %v440 = vld [vmem:[%s320 + $0x30] sm:$0xff]
      %v441 = vld [vmem:[%s320 + $0x38] sm:$0xff]
      %v442 = vld [vmem:[%s320 + $0x40] sm:$0xff]
      %v443 = vld [vmem:[%s320 + $0x48] sm:$0xff]
      %v444 = vld [vmem:[%s320 + $0x50] sm:$0xff]
      %v445 = vld [vmem:[%s320 + $0x58] sm:$0xff]
      %v446 = vld [vmem:[%s320 + $0x60] sm:$0xff]
      %v447 = vld [vmem:[%s320 + $0x68] sm:$0xff]
      %v448 = vld [vmem:[%s320 + $0x70] sm:$0xff]
      %v449 = vld [vmem:[%s320 + $0x78] sm:$0xff]
      %v450 = vpack.c.bf16 %v435, %v434
      %v451 = vpack.c.bf16 %v437, %v436
      %v452 = vpack.c.bf16 %v439, %v438
      %v453 = vpack.c.bf16 %v441, %v440
      %v454 = vpack.c.bf16 %v443, %v442
      %v455 = vpack.c.bf16 %v445, %v444
      %v456 = vpack.c.bf16 %v447, %v446
      %v457 = vpack.c.bf16 %v449, %v448
      %v459 = vperm.slane %v417, 0
      %v465 = vunpack.c.l.b16 %v409
      %v466 = vunpack.c.l.b16 %v410
      %v467 = vunpack.c.l.b16 %v411
      %v468 = vunpack.c.l.b16 %v412
      %v469 = vpack.c.b16 %v466, %v465
      %v470 = vpack.c.b16 %v468, %v467
      %vm473 = vcmask 261120
      %v475 = vsel %vm473, %v450, 0
      %v478 = vsel %vm473, %v451, 0
      %v481 = vsel %vm473, %v452, 0
      %v484 = vsel %vm473, %v453, 0
      %v487 = vsel %vm473, %v454, 0
      %v490 = vsel %vm473, %v455, 0
      %v493 = vsel %vm473, %v456, 0
      %v496 = vsel %vm473, %v457, 0
      %498 = vmatpush.bf16.msra.mxu0 0
      %499 = vmatpush.bf16.msra.mxu0 0
      %500 = vmatpush.bf16.msra.mxu0 0
      %501 = vmatpush.bf16.msra.mxu0 0
      %502 = vmatpush.bf16.msra.mxu0 0
      %503 = vmatpush.bf16.msra.mxu0 0
      %504 = vmatpush.bf16.msra.mxu0 %v470
      %505 = vmatpush.bf16.msra.mxu0 %v469
      %506 = vmatmul.bf16.gmra.mxu0 %v475
      %v507 = vpop.f32.mrf.mxu0
      %v508 = vadd.f32 %v459, %v507
      %v509 = vpop.f32.mrf.mxu0
      %v510 = vadd.f32 %v459, %v509
      %511 = vmatmul.bf16.gmra.mxu0 %v478
      %v512 = vpop.f32.mrf.mxu0
      %v513 = vadd.f32 %v459, %v512
      %v514 = vpop.f32.mrf.mxu0
      %v515 = vadd.f32 %v459, %v514
      %516 = vmatmul.bf16.gmra.mxu0 %v481
      %v517 = vpop.f32.mrf.mxu0
      %v518 = vadd.f32 %v459, %v517
      %v519 = vpop.f32.mrf.mxu0
      %v520 = vadd.f32 %v459, %v519
      %521 = vmatmul.bf16.gmra.mxu0 %v484
      %v522 = vpop.f32.mrf.mxu0
      %v523 = vadd.f32 %v459, %v522
      %v524 = vpop.f32.mrf.mxu0
      %v525 = vadd.f32 %v459, %v524
      %526 = vmatmul.bf16.gmra.mxu0 %v487
      %v527 = vpop.f32.mrf.mxu0
      %v528 = vadd.f32 %v459, %v527
      %v529 = vpop.f32.mrf.mxu0
      %v530 = vadd.f32 %v459, %v529
      %531 = vmatmul.bf16.gmra.mxu0 %v490
      %v532 = vpop.f32.mrf.mxu0
      %v533 = vadd.f32 %v459, %v532
      %v534 = vpop.f32.mrf.mxu0
      %v535 = vadd.f32 %v459, %v534
      %536 = vmatmul.bf16.gmra.mxu0 %v493
      %v537 = vpop.f32.mrf.mxu0
      %v538 = vadd.f32 %v459, %v537
      %v539 = vpop.f32.mrf.mxu0
      %v540 = vadd.f32 %v459, %v539
      %541 = vmatmul.bf16.gmra.mxu0 %v496
      %v542 = vpop.f32.mrf.mxu0
      %v543 = vadd.f32 %v459, %v542
      %v544 = vpop.f32.mrf.mxu0
      %v545 = vadd.f32 %v459, %v544
      %546 = vdwg.mxu0
      %v563 = vunpack.c.l.b16 %v345
      %v564 = vunpack.c.l.b16 %v346
      %v565 = vunpack.c.l.b16 %v347
      %v566 = vunpack.c.l.b16 %v348
      %v567 = vunpack.c.l.b16 %v349
      %v568 = vunpack.c.l.b16 %v350
      %v569 = vunpack.c.l.b16 %v351
      %v570 = vunpack.c.l.b16 %v352
      %v571 = vunpack.c.l.b16 %v353
      %v572 = vunpack.c.l.b16 %v354
      %v573 = vunpack.c.l.b16 %v355
      %v574 = vunpack.c.l.b16 %v356
      %v575 = vunpack.c.l.b16 %v357
      %v576 = vunpack.c.l.b16 %v358
      %v577 = vunpack.c.l.b16 %v359
      %v578 = vunpack.c.l.b16 %v360
      %v579 = vpack.c.b16 %v564, %v563
      %v580 = vpack.c.b16 %v566, %v565
      %v581 = vpack.c.b16 %v568, %v567
      %v582 = vpack.c.b16 %v570, %v569
      %v583 = vpack.c.b16 %v572, %v571
      %v584 = vpack.c.b16 %v574, %v573
      %v585 = vpack.c.b16 %v576, %v575
      %v586 = vpack.c.b16 %v578, %v577
      %595 = vmatpush.bf16.msra.mxu0 %v457
      %596 = vmatpush.bf16.msra.mxu0 %v456
      %597 = vmatpush.bf16.msra.mxu0 %v455
      %598 = vmatpush.bf16.msra.mxu0 %v454
      %599 = vmatpush.bf16.msra.mxu0 %v453
      %600 = vmatpush.bf16.msra.mxu0 %v452
      %601 = vmatpush.bf16.msra.mxu0 %v451
      %602 = vmatpush.bf16.msra.mxu0 %v450
      %603 = vmatmul.bf16.gmra.mxu0 %v579
      %v604 = vpop.f32.mrf.mxu0
      %v605 = vadd.f32 0.0, %v604
      %v606 = vpop.f32.mrf.mxu0
      %v607 = vadd.f32 0.0, %v606
      %608 = vmatmul.bf16.gmra.mxu0 %v580
      %v609 = vpop.f32.mrf.mxu0
      %v610 = vadd.f32 0.0, %v609
      %v611 = vpop.f32.mrf.mxu0
      %v612 = vadd.f32 0.0, %v611
      %613 = vmatmul.bf16.gmra.mxu0 %v581
      %v614 = vpop.f32.mrf.mxu0
      %v615 = vadd.f32 0.0, %v614
      %v616 = vpop.f32.mrf.mxu0
      %v617 = vadd.f32 0.0, %v616
      %618 = vmatmul.bf16.gmra.mxu0 %v582
      %v619 = vpop.f32.mrf.mxu0
      %v620 = vadd.f32 0.0, %v619
      %v621 = vpop.f32.mrf.mxu0
      %v622 = vadd.f32 0.0, %v621
      %623 = vmatmul.bf16.gmra.mxu0 %v583
      %v624 = vpop.f32.mrf.mxu0
      %v625 = vadd.f32 0.0, %v624
      %v626 = vpop.f32.mrf.mxu0
      %v627 = vadd.f32 0.0, %v626
      %628 = vmatmul.bf16.gmra.mxu0 %v584
      %v629 = vpop.f32.mrf.mxu0
      %v630 = vadd.f32 0.0, %v629
      %v631 = vpop.f32.mrf.mxu0
      %v632 = vadd.f32 0.0, %v631
      %633 = vmatmul.bf16.gmra.mxu0 %v585
      %v634 = vpop.f32.mrf.mxu0
      %v635 = vadd.f32 0.0, %v634
      %v636 = vpop.f32.mrf.mxu0
      %v637 = vadd.f32 0.0, %v636
      %638 = vmatmul.bf16.gmra.mxu0 %v586
      %v639 = vpop.f32.mrf.mxu0
      %v640 = vadd.f32 0.0, %v639
      %v641 = vpop.f32.mrf.mxu0
      %v642 = vadd.f32 0.0, %v641
      %643 = vdwg.mxu0
      %v644 = vpack.c.bf16 %v607, %v605
      %v645 = vpack.c.bf16 %v612, %v610
      %v646 = vpack.c.bf16 %v617, %v615
      %v647 = vpack.c.bf16 %v622, %v620
      %v648 = vpack.c.bf16 %v627, %v625
      %v649 = vpack.c.bf16 %v632, %v630
      %v650 = vpack.c.bf16 %v637, %v635
      %v651 = vpack.c.bf16 %v642, %v640
      %v656 = vunpack.c.l.b16 %v413
      %v657 = vunpack.c.l.b16 %v414
      %v658 = vunpack.c.l.b16 %v415
      %v659 = vunpack.c.l.b16 %v416
      %v660 = vpack.c.b16 %v657, %v656
      %v661 = vpack.c.b16 %v659, %v658
      %v665 = vsel %vm473, %v644, 0
      %v668 = vsel %vm473, %v645, 0
      %v671 = vsel %vm473, %v646, 0
      %v674 = vsel %vm473, %v647, 0
      %v677 = vsel %vm473, %v648, 0
      %v680 = vsel %vm473, %v649, 0
      %v683 = vsel %vm473, %v650, 0
      %v686 = vsel %vm473, %v651, 0
      %688 = vmatpush.bf16.msra.mxu0 0
      %689 = vmatpush.bf16.msra.mxu0 0
      %690 = vmatpush.bf16.msra.mxu0 0
      %691 = vmatpush.bf16.msra.mxu0 0
      %692 = vmatpush.bf16.msra.mxu0 0
      %693 = vmatpush.bf16.msra.mxu0 0
      %694 = vmatpush.bf16.msra.mxu0 %v661
      %695 = vmatpush.bf16.msra.mxu0 %v660
      %696 = vmatmul.bf16.gmra.mxu0 %v665
      %v697 = vpop.f32.mrf.mxu0
      %v698 = vadd.f32 %v418, %v697
      %v699 = vpop.f32.mrf.mxu0
      %v700 = vadd.f32 %v419, %v699
      %701 = vmatmul.bf16.gmra.mxu0 %v668
      %v702 = vpop.f32.mrf.mxu0
      %v703 = vadd.f32 %v420, %v702
      %v704 = vpop.f32.mrf.mxu0
      %v705 = vadd.f32 %v421, %v704
      %706 = vmatmul.bf16.gmra.mxu0 %v671
      %v707 = vpop.f32.mrf.mxu0
      %v708 = vadd.f32 %v422, %v707
      %v709 = vpop.f32.mrf.mxu0
      %v710 = vadd.f32 %v423, %v709
      %711 = vmatmul.bf16.gmra.mxu0 %v674
      %v712 = vpop.f32.mrf.mxu0
      %v713 = vadd.f32 %v424, %v712
      %v714 = vpop.f32.mrf.mxu0
      %v715 = vadd.f32 %v425, %v714
      %716 = vmatmul.bf16.gmra.mxu0 %v677
      %v717 = vpop.f32.mrf.mxu0
      %v718 = vadd.f32 %v426, %v717
      %v719 = vpop.f32.mrf.mxu0
      %v720 = vadd.f32 %v427, %v719
      %721 = vmatmul.bf16.gmra.mxu0 %v680
      %v722 = vpop.f32.mrf.mxu0
      %v723 = vadd.f32 %v428, %v722
      %v724 = vpop.f32.mrf.mxu0
      %v725 = vadd.f32 %v429, %v724
      %726 = vmatmul.bf16.gmra.mxu0 %v683
      %v727 = vpop.f32.mrf.mxu0
      %v728 = vadd.f32 %v430, %v727
      %v729 = vpop.f32.mrf.mxu0
      %v730 = vadd.f32 %v431, %v729
      %731 = vmatmul.bf16.gmra.mxu0 %v686
      %v732 = vpop.f32.mrf.mxu0
      %v733 = vadd.f32 %v432, %v732
      %v734 = vpop.f32.mrf.mxu0
      %v735 = vadd.f32 %v433, %v734
      %736 = vdwg.mxu0
      %v737 = vpack.c.bf16 %v510, %v508
      %v738 = vpack.c.bf16 %v515, %v513
      %v739 = vpack.c.bf16 %v520, %v518
      %v740 = vpack.c.bf16 %v525, %v523
      %v741 = vpack.c.bf16 %v530, %v528
      %v742 = vpack.c.bf16 %v535, %v533
      %v743 = vpack.c.bf16 %v540, %v538
      %v744 = vpack.c.bf16 %v545, %v543
      %v745 = vpack.c.bf16 %v700, %v698
      %v746 = vpack.c.bf16 %v705, %v703
      %v747 = vpack.c.bf16 %v710, %v708
      %v748 = vpack.c.bf16 %v715, %v713
      %v749 = vpack.c.bf16 %v720, %v718
      %v750 = vpack.c.bf16 %v725, %v723
      %v751 = vpack.c.bf16 %v730, %v728
      %v752 = vpack.c.bf16 %v735, %v733
      %v754 = vsel %vm473, %v737, 0
      %v757 = vsel %vm473, %v738, 0
      %v760 = vsel %vm473, %v739, 0
      %v763 = vsel %vm473, %v740, 0
      %v766 = vsel %vm473, %v741, 0
      %v769 = vsel %vm473, %v742, 0
      %v772 = vsel %vm473, %v743, 0
      %v775 = vsel %vm473, %v744, 0
      %v778 = vsel %vm473, %v745, 0
      %v781 = vsel %vm473, %v746, 0
      %v784 = vsel %vm473, %v747, 0
      %v787 = vsel %vm473, %v748, 0
      %v790 = vsel %vm473, %v749, 0
      %v793 = vsel %vm473, %v750, 0
      %v796 = vsel %vm473, %v751, 0
      %v799 = vsel %vm473, %v752, 0
      %801 = vmatpush.bf16.xpose.msra.mxu0 %v799
      %802 = vmatpush.bf16.xpose.msra.mxu0 %v796
      %803 = vmatpush.bf16.xpose.msra.mxu0 %v793
      %804 = vmatpush.bf16.xpose.msra.mxu0 %v790
      %805 = vmatpush.bf16.xpose.msra.mxu0 %v787
      %806 = vmatpush.bf16.xpose.msra.mxu0 %v784
      %807 = vmatpush.bf16.xpose.msra.mxu0 %v781
      %808 = vmatpush.bf16.xpose.msra.mxu0 %v778
      %809 = vmatmul.bf16.gmra.mxu0 %v754
      %v810 = vpop.f32.mrf.mxu0
      %v811 = vadd.f32 0.0, %v810
      %v812 = vpop.f32.mrf.mxu0
      %v813 = vadd.f32 0.0, %v812
      %814 = vmatmul.bf16.gmra.mxu0 %v757
      %v815 = vpop.f32.mrf.mxu0
      %v816 = vadd.f32 0.0, %v815
      %v817 = vpop.f32.mrf.mxu0
      %v818 = vadd.f32 0.0, %v817
      %819 = vmatmul.bf16.gmra.mxu0 %v760
      %v820 = vpop.f32.mrf.mxu0
      %v821 = vadd.f32 0.0, %v820
      %v822 = vpop.f32.mrf.mxu0
      %v823 = vadd.f32 0.0, %v822
      %824 = vmatmul.bf16.gmra.mxu0 %v763
      %v825 = vpop.f32.mrf.mxu0
      %v826 = vadd.f32 0.0, %v825
      %v827 = vpop.f32.mrf.mxu0
      %v828 = vadd.f32 0.0, %v827
      %829 = vmatmul.bf16.gmra.mxu0 %v766
      %v830 = vpop.f32.mrf.mxu0
      %v831 = vadd.f32 0.0, %v830
      %v832 = vpop.f32.mrf.mxu0
      %v833 = vadd.f32 0.0, %v832
      %834 = vmatmul.bf16.gmra.mxu0 %v769
      %v835 = vpop.f32.mrf.mxu0
      %v836 = vadd.f32 0.0, %v835
      %v837 = vpop.f32.mrf.mxu0
      %v838 = vadd.f32 0.0, %v837
      %839 = vmatmul.bf16.gmra.mxu0 %v772
      %v840 = vpop.f32.mrf.mxu0
      %v841 = vadd.f32 0.0, %v840
      %v842 = vpop.f32.mrf.mxu0
      %v843 = vadd.f32 0.0, %v842
      %844 = vmatmul.bf16.gmra.mxu0 %v775
      %v845 = vpop.f32.mrf.mxu0
      %v846 = vadd.f32 0.0, %v845
      %v847 = vpop.f32.mrf.mxu0
      %v848 = vadd.f32 0.0, %v847
      %849 = vdwg.mxu0
      %v850 = vmul.f32 %v811, 0.17677669
      %v851 = vmul.f32 %v813, 0.17677669
      %v852 = vmul.f32 %v816, 0.17677669
      %v853 = vmul.f32 %v818, 0.17677669
      %v854 = vmul.f32 %v821, 0.17677669
      %v855 = vmul.f32 %v823, 0.17677669
      %v856 = vmul.f32 %v826, 0.17677669
      %v857 = vmul.f32 %v828, 0.17677669
      %v858 = vmul.f32 %v831, 0.17677669
      %v859 = vmul.f32 %v833, 0.17677669
      %v860 = vmul.f32 %v836, 0.17677669
      %v861 = vmul.f32 %v838, 0.17677669
      %v862 = vmul.f32 %v841, 0.17677669
      %v863 = vmul.f32 %v843, 0.17677669
      %v864 = vmul.f32 %v846, 0.17677669
      %v865 = vmul.f32 %v848, 0.17677669
      %v866 = vsel %vm393, %v850, -1e+30
      %v867 = vsel %vm394, %v851, -1e+30
      %v868 = vsel %vm395, %v852, -1e+30
      %v869 = vsel %vm396, %v853, -1e+30
      %v870 = vsel %vm397, %v854, -1e+30
      %v871 = vsel %vm398, %v855, -1e+30
      %v872 = vsel %vm399, %v856, -1e+30
      %v873 = vsel %vm400, %v857, -1e+30
      %v874 = vsel %vm401, %v858, -1e+30
      %v875 = vsel %vm402, %v859, -1e+30
      %v876 = vsel %vm403, %v860, -1e+30
      %v877 = vsel %vm404, %v861, -1e+30
      %v878 = vsel %vm405, %v862, -1e+30
      %v879 = vsel %vm406, %v863, -1e+30
      %v880 = vsel %vm407, %v864, -1e+30
      %v881 = vsel %vm408, %v865, -1e+30
      %882 = vmax.xlane.f32.xlu0 %v866
      %v883 = vpop.xlane.xlu0 %882
      %884 = vmax.xlane.f32.xlu0 %v867
      %v885 = vpop.xlane.xlu0 %884
      %886 = vmax.xlane.f32.xlu0 %v868
      %v887 = vpop.xlane.xlu0 %886
      %888 = vmax.xlane.f32.xlu0 %v869
      %v889 = vpop.xlane.xlu0 %888
      %890 = vmax.xlane.f32.xlu0 %v870
      %v891 = vpop.xlane.xlu0 %890
      %892 = vmax.xlane.f32.xlu0 %v871
      %v893 = vpop.xlane.xlu0 %892
      %894 = vmax.xlane.f32.xlu0 %v872
      %v895 = vpop.xlane.xlu0 %894
      %896 = vmax.xlane.f32.xlu0 %v873
      %v897 = vpop.xlane.xlu0 %896
      %898 = vmax.xlane.f32.xlu0 %v874
      %v899 = vpop.xlane.xlu0 %898
      %900 = vmax.xlane.f32.xlu0 %v875
      %v901 = vpop.xlane.xlu0 %900
      %902 = vmax.xlane.f32.xlu0 %v876
      %v903 = vpop.xlane.xlu0 %902
      %904 = vmax.xlane.f32.xlu0 %v877
      %v905 = vpop.xlane.xlu0 %904
      %906 = vmax.xlane.f32.xlu0 %v878
      %v907 = vpop.xlane.xlu0 %906
      %908 = vmax.xlane.f32.xlu0 %v879
      %v909 = vpop.xlane.xlu0 %908
      %910 = vmax.xlane.f32.xlu0 %v880
      %v911 = vpop.xlane.xlu0 %910
      %912 = vmax.xlane.f32.xlu0 %v881
      %v913 = vpop.xlane.xlu0 %912
      %v914 = vsub.f32 %v866, %v883
      %v915 = vsub.f32 %v867, %v885
      %v916 = vsub.f32 %v868, %v887
      %v917 = vsub.f32 %v869, %v889
      %v918 = vsub.f32 %v870, %v891
      %v919 = vsub.f32 %v871, %v893
      %v920 = vsub.f32 %v872, %v895
      %v921 = vsub.f32 %v873, %v897
      %v922 = vsub.f32 %v874, %v899
      %v923 = vsub.f32 %v875, %v901
      %v924 = vsub.f32 %v876, %v903
      %v925 = vsub.f32 %v877, %v905
      %v926 = vsub.f32 %v878, %v907
      %v927 = vsub.f32 %v879, %v909
      %v928 = vsub.f32 %v880, %v911
      %v929 = vsub.f32 %v881, %v913
      %v930 = vmul.f32 %v914, 1.442695
      %v931 = vpow.pop %v930
      %v932 = vmul.f32 %v915, 1.442695
      %v933 = vpow.pop %v932
      %v934 = vmul.f32 %v916, 1.442695
      %v935 = vpow.pop %v934
      %v936 = vmul.f32 %v917, 1.442695
      %v937 = vpow.pop %v936
      %v938 = vmul.f32 %v918, 1.442695
      %v939 = vpow.pop %v938
      %v940 = vmul.f32 %v919, 1.442695
      %v941 = vpow.pop %v940
      %v942 = vmul.f32 %v920, 1.442695
      %v943 = vpow.pop %v942
      %v944 = vmul.f32 %v921, 1.442695
      %v945 = vpow.pop %v944
      %v946 = vmul.f32 %v922, 1.442695
      %v947 = vpow.pop %v946
      %v948 = vmul.f32 %v923, 1.442695
      %v949 = vpow.pop %v948
      %v950 = vmul.f32 %v924, 1.442695
      %v951 = vpow.pop %v950
      %v952 = vmul.f32 %v925, 1.442695
      %v953 = vpow.pop %v952
      %v954 = vmul.f32 %v926, 1.442695
      %v955 = vpow.pop %v954
      %v956 = vmul.f32 %v927, 1.442695
      %v957 = vpow.pop %v956
      %v958 = vmul.f32 %v928, 1.442695
      %v959 = vpow.pop %v958
      %v960 = vmul.f32 %v929, 1.442695
      %v961 = vpow.pop %v960
      %v962 = vsel %vm393, %v931, 0.0
      %v963 = vsel %vm394, %v933, 0.0
      %v964 = vsel %vm395, %v935, 0.0
      %v965 = vsel %vm396, %v937, 0.0
      %v966 = vsel %vm397, %v939, 0.0
      %v967 = vsel %vm398, %v941, 0.0
      %v968 = vsel %vm399, %v943, 0.0
      %v969 = vsel %vm400, %v945, 0.0
      %v970 = vsel %vm401, %v947, 0.0
      %v971 = vsel %vm402, %v949, 0.0
      %v972 = vsel %vm403, %v951, 0.0
      %v973 = vsel %vm404, %v953, 0.0
      %v974 = vsel %vm405, %v955, 0.0
      %v975 = vsel %vm406, %v957, 0.0
      %v976 = vsel %vm407, %v959, 0.0
      %v977 = vsel %vm408, %v961, 0.0
      %978 = vadd.xlane.f32.xlu0 %v962
      %v979 = vpop.xlane.xlu0 %978
      %980 = vadd.xlane.f32.xlu0 %v963
      %v981 = vpop.xlane.xlu0 %980
      %982 = vadd.xlane.f32.xlu0 %v964
      %v983 = vpop.xlane.xlu0 %982
      %984 = vadd.xlane.f32.xlu0 %v965
      %v985 = vpop.xlane.xlu0 %984
      %986 = vadd.xlane.f32.xlu0 %v966
      %v987 = vpop.xlane.xlu0 %986
      %988 = vadd.xlane.f32.xlu0 %v967
      %v989 = vpop.xlane.xlu0 %988
      %990 = vadd.xlane.f32.xlu0 %v968
      %v991 = vpop.xlane.xlu0 %990
      %992 = vadd.xlane.f32.xlu0 %v969
      %v993 = vpop.xlane.xlu0 %992
      %994 = vadd.xlane.f32.xlu0 %v970
      %v995 = vpop.xlane.xlu0 %994
      %996 = vadd.xlane.f32.xlu0 %v971
      %v997 = vpop.xlane.xlu0 %996
      %998 = vadd.xlane.f32.xlu0 %v972
      %v999 = vpop.xlane.xlu0 %998
      %1000 = vadd.xlane.f32.xlu0 %v973
      %v1001 = vpop.xlane.xlu0 %1000
      %1002 = vadd.xlane.f32.xlu0 %v974
      %v1003 = vpop.xlane.xlu0 %1002
      %1004 = vadd.xlane.f32.xlu0 %v975
      %v1005 = vpop.xlane.xlu0 %1004
      %1006 = vadd.xlane.f32.xlu0 %v976
      %v1007 = vpop.xlane.xlu0 %1006
      %1008 = vadd.xlane.f32.xlu0 %v977
      %v1009 = vpop.xlane.xlu0 %1008
      %vm1010 = vcmp.gt.f32.partialorder %v979, 0.0
      %vm1011 = vcmp.gt.f32.partialorder %v981, 0.0
      %vm1012 = vcmp.gt.f32.partialorder %v983, 0.0
      %vm1013 = vcmp.gt.f32.partialorder %v985, 0.0
      %vm1014 = vcmp.gt.f32.partialorder %v987, 0.0
      %vm1015 = vcmp.gt.f32.partialorder %v989, 0.0
      %vm1016 = vcmp.gt.f32.partialorder %v991, 0.0
      %vm1017 = vcmp.gt.f32.partialorder %v993, 0.0
      %vm1018 = vcmp.gt.f32.partialorder %v995, 0.0
      %vm1019 = vcmp.gt.f32.partialorder %v997, 0.0
      %vm1020 = vcmp.gt.f32.partialorder %v999, 0.0
      %vm1021 = vcmp.gt.f32.partialorder %v1001, 0.0
      %vm1022 = vcmp.gt.f32.partialorder %v1003, 0.0
      %vm1023 = vcmp.gt.f32.partialorder %v1005, 0.0
      %vm1024 = vcmp.gt.f32.partialorder %v1007, 0.0
      %vm1025 = vcmp.gt.f32.partialorder %v1009, 0.0
      %v1026 = vsel %vm1010, %v979, 1.0
      %v1027 = vsel %vm1011, %v981, 1.0
      %v1028 = vsel %vm1012, %v983, 1.0
      %v1029 = vsel %vm1013, %v985, 1.0
      %v1030 = vsel %vm1014, %v987, 1.0
      %v1031 = vsel %vm1015, %v989, 1.0
      %v1032 = vsel %vm1016, %v991, 1.0
      %v1033 = vsel %vm1017, %v993, 1.0
      %v1034 = vsel %vm1018, %v995, 1.0
      %v1035 = vsel %vm1019, %v997, 1.0
      %v1036 = vsel %vm1020, %v999, 1.0
      %v1037 = vsel %vm1021, %v1001, 1.0
      %v1038 = vsel %vm1022, %v1003, 1.0
      %v1039 = vsel %vm1023, %v1005, 1.0
      %v1040 = vsel %vm1024, %v1007, 1.0
      %v1041 = vsel %vm1025, %v1009, 1.0
      %v1042 = vrcp.pop %v1026
      %v1043 = vrcp.pop %v1027
      %v1044 = vrcp.pop %v1028
      %v1045 = vrcp.pop %v1029
      %v1046 = vrcp.pop %v1030
      %v1047 = vrcp.pop %v1031
      %v1048 = vrcp.pop %v1032
      %v1049 = vrcp.pop %v1033
      %v1050 = vrcp.pop %v1034
      %v1051 = vrcp.pop %v1035
      %v1052 = vrcp.pop %v1036
      %v1053 = vrcp.pop %v1037
      %v1054 = vrcp.pop %v1038
      %v1055 = vrcp.pop %v1039
      %v1056 = vrcp.pop %v1040
      %v1057 = vrcp.pop %v1041
      %v1058 = vmul.f32 %v962, %v1042
      %v1059 = vmul.f32 %v963, %v1043
      %v1060 = vmul.f32 %v964, %v1044
      %v1061 = vmul.f32 %v965, %v1045
      %v1062 = vmul.f32 %v966, %v1046
      %v1063 = vmul.f32 %v967, %v1047
      %v1064 = vmul.f32 %v968, %v1048
      %v1065 = vmul.f32 %v969, %v1049
      %v1066 = vmul.f32 %v970, %v1050
      %v1067 = vmul.f32 %v971, %v1051
      %v1068 = vmul.f32 %v972, %v1052
      %v1069 = vmul.f32 %v973, %v1053
      %v1070 = vmul.f32 %v974, %v1054
      %v1071 = vmul.f32 %v975, %v1055
      %v1072 = vmul.f32 %v976, %v1056
      %v1073 = vmul.f32 %v977, %v1057
      %v1074 = vpack.c.bf16 %v1059, %v1058
      %v1075 = vpack.c.bf16 %v1061, %v1060
      %v1076 = vpack.c.bf16 %v1063, %v1062
      %v1077 = vpack.c.bf16 %v1065, %v1064
      %v1078 = vpack.c.bf16 %v1067, %v1066
      %v1079 = vpack.c.bf16 %v1069, %v1068
      %v1080 = vpack.c.bf16 %v1071, %v1070
      %v1081 = vpack.c.bf16 %v1073, %v1072
      %1090 = vrot.lane.b32.xlu0 %v745, 96
      %v1091 = vpop.permute.xlu0 %1090
      %1092 = vrot.lane.b32.xlu0 %v746, 96
      %v1093 = vpop.permute.xlu0 %1092
      %1094 = vrot.lane.b32.xlu0 %v747, 96
      %v1095 = vpop.permute.xlu0 %1094
      %1096 = vrot.lane.b32.xlu0 %v748, 96
      %v1097 = vpop.permute.xlu0 %1096
      %1098 = vrot.lane.b32.xlu0 %v749, 96
      %v1099 = vpop.permute.xlu0 %1098
      %1100 = vrot.lane.b32.xlu0 %v750, 96
      %v1101 = vpop.permute.xlu0 %1100
      %1102 = vrot.lane.b32.xlu0 %v751, 96
      %v1103 = vpop.permute.xlu0 %1102
      %1104 = vrot.lane.b32.xlu0 %v752, 96
      %v1105 = vpop.permute.xlu0 %1104
      %1114 = vmatpush.bf16.msra.mxu0 %v1105
      %1115 = vmatpush.bf16.msra.mxu0 %v1103
      %1116 = vmatpush.bf16.msra.mxu0 %v1101
      %1117 = vmatpush.bf16.msra.mxu0 %v1099
      %1118 = vmatpush.bf16.msra.mxu0 %v1097
      %1119 = vmatpush.bf16.msra.mxu0 %v1095
      %1120 = vmatpush.bf16.msra.mxu0 %v1093
      %1121 = vmatpush.bf16.msra.mxu0 %v1091
      %1122 = vmatmul.bf16.gmra.mxu0 %v1074
      %v1123 = vpop.f32.mrf.mxu0
      %v1124 = vadd.f32 0.0, %v1123
      %v1125 = vpop.f32.mrf.mxu0
      %v1126 = vadd.f32 0.0, %v1125
      %1127 = vmatmul.bf16.gmra.mxu0 %v1075
      %v1128 = vpop.f32.mrf.mxu0
      %v1129 = vadd.f32 0.0, %v1128
      %v1130 = vpop.f32.mrf.mxu0
      %v1131 = vadd.f32 0.0, %v1130
      %1132 = vmatmul.bf16.gmra.mxu0 %v1076
      %v1133 = vpop.f32.mrf.mxu0
      %v1134 = vadd.f32 0.0, %v1133
      %v1135 = vpop.f32.mrf.mxu0
      %v1136 = vadd.f32 0.0, %v1135
      %1137 = vmatmul.bf16.gmra.mxu0 %v1077
      %v1138 = vpop.f32.mrf.mxu0
      %v1139 = vadd.f32 0.0, %v1138
      %v1140 = vpop.f32.mrf.mxu0
      %v1141 = vadd.f32 0.0, %v1140
      %1142 = vmatmul.bf16.gmra.mxu0 %v1078
      %v1143 = vpop.f32.mrf.mxu0
      %v1144 = vadd.f32 0.0, %v1143
      %v1145 = vpop.f32.mrf.mxu0
      %v1146 = vadd.f32 0.0, %v1145
      %1147 = vmatmul.bf16.gmra.mxu0 %v1079
      %v1148 = vpop.f32.mrf.mxu0
      %v1149 = vadd.f32 0.0, %v1148
      %v1150 = vpop.f32.mrf.mxu0
      %v1151 = vadd.f32 0.0, %v1150
      %1152 = vmatmul.bf16.gmra.mxu0 %v1080
      %v1153 = vpop.f32.mrf.mxu0
      %v1154 = vadd.f32 0.0, %v1153
      %v1155 = vpop.f32.mrf.mxu0
      %v1156 = vadd.f32 0.0, %v1155
      %1157 = vmatmul.bf16.gmra.mxu0 %v1081
      %v1158 = vpop.f32.mrf.mxu0
      %v1159 = vadd.f32 0.0, %v1158
      %v1160 = vpop.f32.mrf.mxu0
      %v1161 = vadd.f32 0.0, %v1160
      %1162 = vdwg.mxu0
      %1179 = vrot.lane.b32.xlu0 %v1124, 64
      %v1180 = vpop.permute.xlu0 %1179
      %1181 = vrot.lane.b32.xlu0 %v1126, 64
      %v1182 = vpop.permute.xlu0 %1181
      %1183 = vrot.lane.b32.xlu0 %v1129, 64
      %v1184 = vpop.permute.xlu0 %1183
      %1185 = vrot.lane.b32.xlu0 %v1131, 64
      %v1186 = vpop.permute.xlu0 %1185
      %1187 = vrot.lane.b32.xlu0 %v1134, 64
      %v1188 = vpop.permute.xlu0 %1187
      %1189 = vrot.lane.b32.xlu0 %v1136, 64
      %v1190 = vpop.permute.xlu0 %1189
      %1191 = vrot.lane.b32.xlu0 %v1139, 64
      %v1192 = vpop.permute.xlu0 %1191
      %1193 = vrot.lane.b32.xlu0 %v1141, 64
      %v1194 = vpop.permute.xlu0 %1193
      %1195 = vrot.lane.b32.xlu0 %v1144, 64
      %v1196 = vpop.permute.xlu0 %1195
      %1197 = vrot.lane.b32.xlu0 %v1146, 64
      %v1198 = vpop.permute.xlu0 %1197
      %1199 = vrot.lane.b32.xlu0 %v1149, 64
      %v1200 = vpop.permute.xlu0 %1199
      %1201 = vrot.lane.b32.xlu0 %v1151, 64
      %v1202 = vpop.permute.xlu0 %1201
      %1203 = vrot.lane.b32.xlu0 %v1154, 64
      %v1204 = vpop.permute.xlu0 %1203
      %1205 = vrot.lane.b32.xlu0 %v1156, 64
      %v1206 = vpop.permute.xlu0 %1205
      %1207 = vrot.lane.b32.xlu0 %v1159, 64
      %v1208 = vpop.permute.xlu0 %1207
      %1209 = vrot.lane.b32.xlu0 %v1161, 64
      %v1210 = vpop.permute.xlu0 %1209
      %v1227 = vadd.f32 %v508, %v1180
      %v1228 = vadd.f32 %v510, %v1182
      %v1229 = vadd.f32 %v513, %v1184
      %v1230 = vadd.f32 %v515, %v1186
      %v1231 = vadd.f32 %v518, %v1188
      %v1232 = vadd.f32 %v520, %v1190
      %v1233 = vadd.f32 %v523, %v1192
      %v1234 = vadd.f32 %v525, %v1194
      %v1235 = vadd.f32 %v528, %v1196
      %v1236 = vadd.f32 %v530, %v1198
      %v1237 = vadd.f32 %v533, %v1200
      %v1238 = vadd.f32 %v535, %v1202
      %v1239 = vadd.f32 %v538, %v1204
      %v1240 = vadd.f32 %v540, %v1206
      %v1241 = vadd.f32 %v543, %v1208
      %v1242 = vadd.f32 %v545, %v1210
      %1259 = vrot.lane.b32.xlu0 %v508, 32
      %v1260 = vpop.permute.xlu0 %1259
      %1261 = vrot.lane.b32.xlu0 %v510, 32
      %v1262 = vpop.permute.xlu0 %1261
      %1263 = vrot.lane.b32.xlu0 %v513, 32
      %v1264 = vpop.permute.xlu0 %1263
      %1265 = vrot.lane.b32.xlu0 %v515, 32
      %v1266 = vpop.permute.xlu0 %1265
      %1267 = vrot.lane.b32.xlu0 %v518, 32
      %v1268 = vpop.permute.xlu0 %1267
      %1269 = vrot.lane.b32.xlu0 %v520, 32
      %v1270 = vpop.permute.xlu0 %1269
      %1271 = vrot.lane.b32.xlu0 %v523, 32
      %v1272 = vpop.permute.xlu0 %1271
      %1273 = vrot.lane.b32.xlu0 %v525, 32
      %v1274 = vpop.permute.xlu0 %1273
      %1275 = vrot.lane.b32.xlu0 %v528, 32
      %v1276 = vpop.permute.xlu0 %1275
      %1277 = vrot.lane.b32.xlu0 %v530, 32
      %v1278 = vpop.permute.xlu0 %1277
      %1279 = vrot.lane.b32.xlu0 %v533, 32
      %v1280 = vpop.permute.xlu0 %1279
      %1281 = vrot.lane.b32.xlu0 %v535, 32
      %v1282 = vpop.permute.xlu0 %1281
      %1283 = vrot.lane.b32.xlu0 %v538, 32
      %v1284 = vpop.permute.xlu0 %1283
      %1285 = vrot.lane.b32.xlu0 %v540, 32
      %v1286 = vpop.permute.xlu0 %1285
      %1287 = vrot.lane.b32.xlu0 %v543, 32
      %v1288 = vpop.permute.xlu0 %1287
      %1289 = vrot.lane.b32.xlu0 %v545, 32
      %v1290 = vpop.permute.xlu0 %1289
      %v1307 = vadd.f32 %v1227, %v1260
      %v1308 = vadd.f32 %v1228, %v1262
      %v1309 = vadd.f32 %v1229, %v1264
      %v1310 = vadd.f32 %v1230, %v1266
      %v1311 = vadd.f32 %v1231, %v1268
      %v1312 = vadd.f32 %v1232, %v1270
      %v1313 = vadd.f32 %v1233, %v1272
      %v1314 = vadd.f32 %v1234, %v1274
      %v1315 = vadd.f32 %v1235, %v1276
      %v1316 = vadd.f32 %v1236, %v1278
      %v1317 = vadd.f32 %v1237, %v1280
      %v1318 = vadd.f32 %v1238, %v1282
      %v1319 = vadd.f32 %v1239, %v1284
      %v1320 = vadd.f32 %v1240, %v1286
      %v1321 = vadd.f32 %v1241, %v1288
      %v1322 = vadd.f32 %v1242, %v1290
      %v1323 = vtanh.pop %v1307
      %v1324 = vtanh.pop %v1308
      %v1325 = vtanh.pop %v1309
      %v1326 = vtanh.pop %v1310
      %v1327 = vtanh.pop %v1311
      %v1328 = vtanh.pop %v1312
      %v1329 = vtanh.pop %v1313
      %v1330 = vtanh.pop %v1314
      %v1331 = vtanh.pop %v1315
      %v1332 = vtanh.pop %v1316
      %v1333 = vtanh.pop %v1317
      %v1334 = vtanh.pop %v1318
      %v1335 = vtanh.pop %v1319
      %v1336 = vtanh.pop %v1320
      %v1337 = vtanh.pop %v1321
      %v1338 = vtanh.pop %v1322
      %v1339 = vmul.f32 %v1323, 0.1
      %v1340 = vmul.f32 %v1324, 0.1
      %v1341 = vmul.f32 %v1325, 0.1
      %v1342 = vmul.f32 %v1326, 0.1
      %v1343 = vmul.f32 %v1327, 0.1
      %v1344 = vmul.f32 %v1328, 0.1
      %v1345 = vmul.f32 %v1329, 0.1
      %v1346 = vmul.f32 %v1330, 0.1
      %v1347 = vmul.f32 %v1331, 0.1
      %v1348 = vmul.f32 %v1332, 0.1
      %v1349 = vmul.f32 %v1333, 0.1
      %v1350 = vmul.f32 %v1334, 0.1
      %v1351 = vmul.f32 %v1335, 0.1
      %v1352 = vmul.f32 %v1336, 0.1
      %v1353 = vmul.f32 %v1337, 0.1
      %v1354 = vmul.f32 %v1338, 0.1
      %1371 = vrot.lane.b32.xlu0 %v1339, 64
      %v1372 = vpop.permute.xlu0 %1371
      %1373 = vrot.lane.b32.xlu0 %v1340, 64
      %v1374 = vpop.permute.xlu0 %1373
      %1375 = vrot.lane.b32.xlu0 %v1341, 64
      %v1376 = vpop.permute.xlu0 %1375
      %1377 = vrot.lane.b32.xlu0 %v1342, 64
      %v1378 = vpop.permute.xlu0 %1377
      %1379 = vrot.lane.b32.xlu0 %v1343, 64
      %v1380 = vpop.permute.xlu0 %1379
      %1381 = vrot.lane.b32.xlu0 %v1344, 64
      %v1382 = vpop.permute.xlu0 %1381
      %1383 = vrot.lane.b32.xlu0 %v1345, 64
      %v1384 = vpop.permute.xlu0 %1383
      %1385 = vrot.lane.b32.xlu0 %v1346, 64
      %v1386 = vpop.permute.xlu0 %1385
      %1387 = vrot.lane.b32.xlu0 %v1347, 64
      %v1388 = vpop.permute.xlu0 %1387
      %1389 = vrot.lane.b32.xlu0 %v1348, 64
      %v1390 = vpop.permute.xlu0 %1389
      %1391 = vrot.lane.b32.xlu0 %v1349, 64
      %v1392 = vpop.permute.xlu0 %1391
      %1393 = vrot.lane.b32.xlu0 %v1350, 64
      %v1394 = vpop.permute.xlu0 %1393
      %1395 = vrot.lane.b32.xlu0 %v1351, 64
      %v1396 = vpop.permute.xlu0 %1395
      %1397 = vrot.lane.b32.xlu0 %v1352, 64
      %v1398 = vpop.permute.xlu0 %1397
      %1399 = vrot.lane.b32.xlu0 %v1353, 64
      %v1400 = vpop.permute.xlu0 %1399
      %1401 = vrot.lane.b32.xlu0 %v1354, 64
      %v1402 = vpop.permute.xlu0 %1401
      %v1419 = vadd.f32 %v434, %v1372
      %v1420 = vadd.f32 %v435, %v1374
      %v1421 = vadd.f32 %v436, %v1376
      %v1422 = vadd.f32 %v437, %v1378
      %v1423 = vadd.f32 %v438, %v1380
      %v1424 = vadd.f32 %v439, %v1382
      %v1425 = vadd.f32 %v440, %v1384
      %v1426 = vadd.f32 %v441, %v1386
      %v1427 = vadd.f32 %v442, %v1388
      %v1428 = vadd.f32 %v443, %v1390
      %v1429 = vadd.f32 %v444, %v1392
      %v1430 = vadd.f32 %v445, %v1394
      %v1431 = vadd.f32 %v446, %v1396
      %v1432 = vadd.f32 %v447, %v1398
      %v1433 = vadd.f32 %v448, %v1400
      %v1434 = vadd.f32 %v449, %v1402
      %v1435 = vpack.c.bf16 %v1420, %v1419
      %v1436 = vpack.c.bf16 %v1422, %v1421
      %v1437 = vpack.c.bf16 %v1424, %v1423
      %v1438 = vpack.c.bf16 %v1426, %v1425
      %v1439 = vpack.c.bf16 %v1428, %v1427
      %v1440 = vpack.c.bf16 %v1430, %v1429
      %v1441 = vpack.c.bf16 %v1432, %v1431
      %v1442 = vpack.c.bf16 %v1434, %v1433
      %v1444 = vsel %vm473, %v1435, 0
      %v1447 = vsel %vm473, %v1436, 0
      %v1450 = vsel %vm473, %v1437, 0
      %v1453 = vsel %vm473, %v1438, 0
      %v1456 = vsel %vm473, %v1439, 0
      %v1459 = vsel %vm473, %v1440, 0
      %v1462 = vsel %vm473, %v1441, 0
      %v1465 = vsel %vm473, %v1442, 0
      %1467 = vmatpush.bf16.msra.mxu0 0
      %1468 = vmatpush.bf16.msra.mxu0 0
      %1469 = vmatpush.bf16.msra.mxu0 0
      %1470 = vmatpush.bf16.msra.mxu0 0
      %1471 = vmatpush.bf16.msra.mxu0 0
      %1472 = vmatpush.bf16.msra.mxu0 0
      %1473 = vmatpush.bf16.msra.mxu0 %v470
      %1474 = vmatpush.bf16.msra.mxu0 %v469
      %1475 = vmatmul.bf16.gmra.mxu0 %v1444
      %v1476 = vpop.f32.mrf.mxu0
      %v1477 = vadd.f32 %v459, %v1476
      %v1478 = vpop.f32.mrf.mxu0
      %v1479 = vadd.f32 %v459, %v1478
      %1480 = vmatmul.bf16.gmra.mxu0 %v1447
      %v1481 = vpop.f32.mrf.mxu0
      %v1482 = vadd.f32 %v459, %v1481
      %v1483 = vpop.f32.mrf.mxu0
      %v1484 = vadd.f32 %v459, %v1483
      %1485 = vmatmul.bf16.gmra.mxu0 %v1450
      %v1486 = vpop.f32.mrf.mxu0
      %v1487 = vadd.f32 %v459, %v1486
      %v1488 = vpop.f32.mrf.mxu0
      %v1489 = vadd.f32 %v459, %v1488
      %1490 = vmatmul.bf16.gmra.mxu0 %v1453
      %v1491 = vpop.f32.mrf.mxu0
      %v1492 = vadd.f32 %v459, %v1491
      %v1493 = vpop.f32.mrf.mxu0
      %v1494 = vadd.f32 %v459, %v1493
      %1495 = vmatmul.bf16.gmra.mxu0 %v1456
      %v1496 = vpop.f32.mrf.mxu0
      %v1497 = vadd.f32 %v459, %v1496
      %v1498 = vpop.f32.mrf.mxu0
      %v1499 = vadd.f32 %v459, %v1498
      %1500 = vmatmul.bf16.gmra.mxu0 %v1459
      %v1501 = vpop.f32.mrf.mxu0
      %v1502 = vadd.f32 %v459, %v1501
      %v1503 = vpop.f32.mrf.mxu0
      %v1504 = vadd.f32 %v459, %v1503
      %1505 = vmatmul.bf16.gmra.mxu0 %v1462
      %v1506 = vpop.f32.mrf.mxu0
      %v1507 = vadd.f32 %v459, %v1506
      %v1508 = vpop.f32.mrf.mxu0
      %v1509 = vadd.f32 %v459, %v1508
      %1510 = vmatmul.bf16.gmra.mxu0 %v1465
      %v1511 = vpop.f32.mrf.mxu0
      %v1512 = vadd.f32 %v459, %v1511
      %v1513 = vpop.f32.mrf.mxu0
      %v1514 = vadd.f32 %v459, %v1513
      %1515 = vdwg.mxu0
      %1516 = vmatpush.bf16.msra.mxu0 %v1442
      %1517 = vmatpush.bf16.msra.mxu0 %v1441
      %1518 = vmatpush.bf16.msra.mxu0 %v1440
      %1519 = vmatpush.bf16.msra.mxu0 %v1439
      %1520 = vmatpush.bf16.msra.mxu0 %v1438
      %1521 = vmatpush.bf16.msra.mxu0 %v1437
      %1522 = vmatpush.bf16.msra.mxu0 %v1436
      %1523 = vmatpush.bf16.msra.mxu0 %v1435
      %1524 = vmatmul.bf16.gmra.mxu0 %v579
      %v1525 = vpop.f32.mrf.mxu0
      %v1526 = vadd.f32 0.0, %v1525
      %v1527 = vpop.f32.mrf.mxu0
      %v1528 = vadd.f32 0.0, %v1527
      %1529 = vmatmul.bf16.gmra.mxu0 %v580
      %v1530 = vpop.f32.mrf.mxu0
      %v1531 = vadd.f32 0.0, %v1530
      %v1532 = vpop.f32.mrf.mxu0
      %v1533 = vadd.f32 0.0, %v1532
      %1534 = vmatmul.bf16.gmra.mxu0 %v581
      %v1535 = vpop.f32.mrf.mxu0
      %v1536 = vadd.f32 0.0, %v1535
      %v1537 = vpop.f32.mrf.mxu0
      %v1538 = vadd.f32 0.0, %v1537
      %1539 = vmatmul.bf16.gmra.mxu0 %v582
      %v1540 = vpop.f32.mrf.mxu0
      %v1541 = vadd.f32 0.0, %v1540
      %v1542 = vpop.f32.mrf.mxu0
      %v1543 = vadd.f32 0.0, %v1542
      %1544 = vmatmul.bf16.gmra.mxu0 %v583
      %v1545 = vpop.f32.mrf.mxu0
      %v1546 = vadd.f32 0.0, %v1545
      %v1547 = vpop.f32.mrf.mxu0
      %v1548 = vadd.f32 0.0, %v1547
      %1549 = vmatmul.bf16.gmra.mxu0 %v584
      %v1550 = vpop.f32.mrf.mxu0
      %v1551 = vadd.f32 0.0, %v1550
      %v1552 = vpop.f32.mrf.mxu0
      %v1553 = vadd.f32 0.0, %v1552
      %1554 = vmatmul.bf16.gmra.mxu0 %v585
      %v1555 = vpop.f32.mrf.mxu0
      %v1556 = vadd.f32 0.0, %v1555
      %v1557 = vpop.f32.mrf.mxu0
      %v1558 = vadd.f32 0.0, %v1557
      %1559 = vmatmul.bf16.gmra.mxu0 %v586
      %v1560 = vpop.f32.mrf.mxu0
      %v1561 = vadd.f32 0.0, %v1560
      %v1562 = vpop.f32.mrf.mxu0
      %v1563 = vadd.f32 0.0, %v1562
      %1564 = vdwg.mxu0
      %v1565 = vpack.c.bf16 %v1528, %v1526
      %v1566 = vpack.c.bf16 %v1533, %v1531
      %v1567 = vpack.c.bf16 %v1538, %v1536
      %v1568 = vpack.c.bf16 %v1543, %v1541
      %v1569 = vpack.c.bf16 %v1548, %v1546
      %v1570 = vpack.c.bf16 %v1553, %v1551
      %v1571 = vpack.c.bf16 %v1558, %v1556
      %v1572 = vpack.c.bf16 %v1563, %v1561
      %v1574 = vsel %vm473, %v1565, 0
      %v1577 = vsel %vm473, %v1566, 0
      %v1580 = vsel %vm473, %v1567, 0
      %v1583 = vsel %vm473, %v1568, 0
      %v1586 = vsel %vm473, %v1569, 0
      %v1589 = vsel %vm473, %v1570, 0
      %v1592 = vsel %vm473, %v1571, 0
      %v1595 = vsel %vm473, %v1572, 0
      %1597 = vmatpush.bf16.msra.mxu0 0
      %1598 = vmatpush.bf16.msra.mxu0 0
      %1599 = vmatpush.bf16.msra.mxu0 0
      %1600 = vmatpush.bf16.msra.mxu0 0
      %1601 = vmatpush.bf16.msra.mxu0 0
      %1602 = vmatpush.bf16.msra.mxu0 0
      %1603 = vmatpush.bf16.msra.mxu0 %v661
      %1604 = vmatpush.bf16.msra.mxu0 %v660
      %1605 = vmatmul.bf16.gmra.mxu0 %v1574
      %v1606 = vpop.f32.mrf.mxu0
      %v1607 = vadd.f32 %v418, %v1606
      %v1608 = vpop.f32.mrf.mxu0
      %v1609 = vadd.f32 %v419, %v1608
      %1610 = vmatmul.bf16.gmra.mxu0 %v1577
      %v1611 = vpop.f32.mrf.mxu0
      %v1612 = vadd.f32 %v420, %v1611
      %v1613 = vpop.f32.mrf.mxu0
      %v1614 = vadd.f32 %v421, %v1613
      %1615 = vmatmul.bf16.gmra.mxu0 %v1580
      %v1616 = vpop.f32.mrf.mxu0
      %v1617 = vadd.f32 %v422, %v1616
      %v1618 = vpop.f32.mrf.mxu0
      %v1619 = vadd.f32 %v423, %v1618
      %1620 = vmatmul.bf16.gmra.mxu0 %v1583
      %v1621 = vpop.f32.mrf.mxu0
      %v1622 = vadd.f32 %v424, %v1621
      %v1623 = vpop.f32.mrf.mxu0
      %v1624 = vadd.f32 %v425, %v1623
      %1625 = vmatmul.bf16.gmra.mxu0 %v1586
      %v1626 = vpop.f32.mrf.mxu0
      %v1627 = vadd.f32 %v426, %v1626
      %v1628 = vpop.f32.mrf.mxu0
      %v1629 = vadd.f32 %v427, %v1628
      %1630 = vmatmul.bf16.gmra.mxu0 %v1589
      %v1631 = vpop.f32.mrf.mxu0
      %v1632 = vadd.f32 %v428, %v1631
      %v1633 = vpop.f32.mrf.mxu0
      %v1634 = vadd.f32 %v429, %v1633
      %1635 = vmatmul.bf16.gmra.mxu0 %v1592
      %v1636 = vpop.f32.mrf.mxu0
      %v1637 = vadd.f32 %v430, %v1636
      %v1638 = vpop.f32.mrf.mxu0
      %v1639 = vadd.f32 %v431, %v1638
      %1640 = vmatmul.bf16.gmra.mxu0 %v1595
      %v1641 = vpop.f32.mrf.mxu0
      %v1642 = vadd.f32 %v432, %v1641
      %v1643 = vpop.f32.mrf.mxu0
      %v1644 = vadd.f32 %v433, %v1643
      %1645 = vdwg.mxu0
      %v1646 = vpack.c.bf16 %v1479, %v1477
      %v1647 = vpack.c.bf16 %v1484, %v1482
      %v1648 = vpack.c.bf16 %v1489, %v1487
      %v1649 = vpack.c.bf16 %v1494, %v1492
      %v1650 = vpack.c.bf16 %v1499, %v1497
      %v1651 = vpack.c.bf16 %v1504, %v1502
      %v1652 = vpack.c.bf16 %v1509, %v1507
      %v1653 = vpack.c.bf16 %v1514, %v1512
      %v1654 = vpack.c.bf16 %v1609, %v1607
      %v1655 = vpack.c.bf16 %v1614, %v1612
      %v1656 = vpack.c.bf16 %v1619, %v1617
      %v1657 = vpack.c.bf16 %v1624, %v1622
      %v1658 = vpack.c.bf16 %v1629, %v1627
      %v1659 = vpack.c.bf16 %v1634, %v1632
      %v1660 = vpack.c.bf16 %v1639, %v1637
      %v1661 = vpack.c.bf16 %v1644, %v1642
      %v1663 = vsel %vm473, %v1646, 0
      %v1666 = vsel %vm473, %v1647, 0
      %v1669 = vsel %vm473, %v1648, 0
      %v1672 = vsel %vm473, %v1649, 0
      %v1675 = vsel %vm473, %v1650, 0
      %v1678 = vsel %vm473, %v1651, 0
      %v1681 = vsel %vm473, %v1652, 0
      %v1684 = vsel %vm473, %v1653, 0
      %v1687 = vsel %vm473, %v1654, 0
      %v1690 = vsel %vm473, %v1655, 0
      %v1693 = vsel %vm473, %v1656, 0
      %v1696 = vsel %vm473, %v1657, 0
      %v1699 = vsel %vm473, %v1658, 0
      %v1702 = vsel %vm473, %v1659, 0
      %v1705 = vsel %vm473, %v1660, 0
      %v1708 = vsel %vm473, %v1661, 0
      %1710 = vmatpush.bf16.xpose.msra.mxu0 %v1708
      %1711 = vmatpush.bf16.xpose.msra.mxu0 %v1705
      %1712 = vmatpush.bf16.xpose.msra.mxu0 %v1702
      %1713 = vmatpush.bf16.xpose.msra.mxu0 %v1699
      %1714 = vmatpush.bf16.xpose.msra.mxu0 %v1696
      %1715 = vmatpush.bf16.xpose.msra.mxu0 %v1693
      %1716 = vmatpush.bf16.xpose.msra.mxu0 %v1690
      %1717 = vmatpush.bf16.xpose.msra.mxu0 %v1687
      %1718 = vmatmul.bf16.gmra.mxu0 %v1663
      %v1719 = vpop.f32.mrf.mxu0
      %v1720 = vadd.f32 0.0, %v1719
      %v1721 = vpop.f32.mrf.mxu0
      %v1722 = vadd.f32 0.0, %v1721
      %1723 = vmatmul.bf16.gmra.mxu0 %v1666
      %v1724 = vpop.f32.mrf.mxu0
      %v1725 = vadd.f32 0.0, %v1724
      %v1726 = vpop.f32.mrf.mxu0
      %v1727 = vadd.f32 0.0, %v1726
      %1728 = vmatmul.bf16.gmra.mxu0 %v1669
      %v1729 = vpop.f32.mrf.mxu0
      %v1730 = vadd.f32 0.0, %v1729
      %v1731 = vpop.f32.mrf.mxu0
      %v1732 = vadd.f32 0.0, %v1731
      %1733 = vmatmul.bf16.gmra.mxu0 %v1672
      %v1734 = vpop.f32.mrf.mxu0
      %v1735 = vadd.f32 0.0, %v1734
      %v1736 = vpop.f32.mrf.mxu0
      %v1737 = vadd.f32 0.0, %v1736
      %1738 = vmatmul.bf16.gmra.mxu0 %v1675
      %v1739 = vpop.f32.mrf.mxu0
      %v1740 = vadd.f32 0.0, %v1739
      %v1741 = vpop.f32.mrf.mxu0
      %v1742 = vadd.f32 0.0, %v1741
      %1743 = vmatmul.bf16.gmra.mxu0 %v1678
      %v1744 = vpop.f32.mrf.mxu0
      %v1745 = vadd.f32 0.0, %v1744
      %v1746 = vpop.f32.mrf.mxu0
      %v1747 = vadd.f32 0.0, %v1746
      %1748 = vmatmul.bf16.gmra.mxu0 %v1681
      %v1749 = vpop.f32.mrf.mxu0
      %v1750 = vadd.f32 0.0, %v1749
      %v1751 = vpop.f32.mrf.mxu0
      %v1752 = vadd.f32 0.0, %v1751
      %1753 = vmatmul.bf16.gmra.mxu0 %v1684
      %v1754 = vpop.f32.mrf.mxu0
      %v1755 = vadd.f32 0.0, %v1754
      %v1756 = vpop.f32.mrf.mxu0
      %v1757 = vadd.f32 0.0, %v1756
      %1758 = vdwg.mxu0
      %v1759 = vmul.f32 %v1720, 0.17677669
      %v1760 = vmul.f32 %v1722, 0.17677669
      %v1761 = vmul.f32 %v1725, 0.17677669
      %v1762 = vmul.f32 %v1727, 0.17677669
      %v1763 = vmul.f32 %v1730, 0.17677669
      %v1764 = vmul.f32 %v1732, 0.17677669
      %v1765 = vmul.f32 %v1735, 0.17677669
      %v1766 = vmul.f32 %v1737, 0.17677669
      %v1767 = vmul.f32 %v1740, 0.17677669
      %v1768 = vmul.f32 %v1742, 0.17677669
      %v1769 = vmul.f32 %v1745, 0.17677669
      %v1770 = vmul.f32 %v1747, 0.17677669
      %v1771 = vmul.f32 %v1750, 0.17677669
      %v1772 = vmul.f32 %v1752, 0.17677669
      %v1773 = vmul.f32 %v1755, 0.17677669
      %v1774 = vmul.f32 %v1757, 0.17677669
      %v1775 = vsel %vm393, %v1759, -1e+30
      %v1776 = vsel %vm394, %v1760, -1e+30
      %v1777 = vsel %vm395, %v1761, -1e+30
      %v1778 = vsel %vm396, %v1762, -1e+30
      %v1779 = vsel %vm397, %v1763, -1e+30
      %v1780 = vsel %vm398, %v1764, -1e+30
      %v1781 = vsel %vm399, %v1765, -1e+30
      %v1782 = vsel %vm400, %v1766, -1e+30
      %v1783 = vsel %vm401, %v1767, -1e+30
      %v1784 = vsel %vm402, %v1768, -1e+30
      %v1785 = vsel %vm403, %v1769, -1e+30
      %v1786 = vsel %vm404, %v1770, -1e+30
      %v1787 = vsel %vm405, %v1771, -1e+30
      %v1788 = vsel %vm406, %v1772, -1e+30
      %v1789 = vsel %vm407, %v1773, -1e+30
      %v1790 = vsel %vm408, %v1774, -1e+30
      %1791 = vmax.xlane.f32.xlu0 %v1775
      %v1792 = vpop.xlane.xlu0 %1791
      %1793 = vmax.xlane.f32.xlu0 %v1776
      %v1794 = vpop.xlane.xlu0 %1793
      %1795 = vmax.xlane.f32.xlu0 %v1777
      %v1796 = vpop.xlane.xlu0 %1795
      %1797 = vmax.xlane.f32.xlu0 %v1778
      %v1798 = vpop.xlane.xlu0 %1797
      %1799 = vmax.xlane.f32.xlu0 %v1779
      %v1800 = vpop.xlane.xlu0 %1799
      %1801 = vmax.xlane.f32.xlu0 %v1780
      %v1802 = vpop.xlane.xlu0 %1801
      %1803 = vmax.xlane.f32.xlu0 %v1781
      %v1804 = vpop.xlane.xlu0 %1803
      %1805 = vmax.xlane.f32.xlu0 %v1782
      %v1806 = vpop.xlane.xlu0 %1805
      %1807 = vmax.xlane.f32.xlu0 %v1783
      %v1808 = vpop.xlane.xlu0 %1807
      %1809 = vmax.xlane.f32.xlu0 %v1784
      %v1810 = vpop.xlane.xlu0 %1809
      %1811 = vmax.xlane.f32.xlu0 %v1785
      %v1812 = vpop.xlane.xlu0 %1811
      %1813 = vmax.xlane.f32.xlu0 %v1786
      %v1814 = vpop.xlane.xlu0 %1813
      %1815 = vmax.xlane.f32.xlu0 %v1787
      %v1816 = vpop.xlane.xlu0 %1815
      %1817 = vmax.xlane.f32.xlu0 %v1788
      %v1818 = vpop.xlane.xlu0 %1817
      %1819 = vmax.xlane.f32.xlu0 %v1789
      %v1820 = vpop.xlane.xlu0 %1819
      %1821 = vmax.xlane.f32.xlu0 %v1790
      %v1822 = vpop.xlane.xlu0 %1821
      %v1823 = vsub.f32 %v1775, %v1792
      %v1824 = vsub.f32 %v1776, %v1794
      %v1825 = vsub.f32 %v1777, %v1796
      %v1826 = vsub.f32 %v1778, %v1798
      %v1827 = vsub.f32 %v1779, %v1800
      %v1828 = vsub.f32 %v1780, %v1802
      %v1829 = vsub.f32 %v1781, %v1804
      %v1830 = vsub.f32 %v1782, %v1806
      %v1831 = vsub.f32 %v1783, %v1808
      %v1832 = vsub.f32 %v1784, %v1810
      %v1833 = vsub.f32 %v1785, %v1812
      %v1834 = vsub.f32 %v1786, %v1814
      %v1835 = vsub.f32 %v1787, %v1816
      %v1836 = vsub.f32 %v1788, %v1818
      %v1837 = vsub.f32 %v1789, %v1820
      %v1838 = vsub.f32 %v1790, %v1822
      %v1839 = vmul.f32 %v1823, 1.442695
      %v1840 = vpow.pop %v1839
      %v1841 = vmul.f32 %v1824, 1.442695
      %v1842 = vpow.pop %v1841
      %v1843 = vmul.f32 %v1825, 1.442695
      %v1844 = vpow.pop %v1843
      %v1845 = vmul.f32 %v1826, 1.442695
      %v1846 = vpow.pop %v1845
      %v1847 = vmul.f32 %v1827, 1.442695
      %v1848 = vpow.pop %v1847
      %v1849 = vmul.f32 %v1828, 1.442695
      %v1850 = vpow.pop %v1849
      %v1851 = vmul.f32 %v1829, 1.442695
      %v1852 = vpow.pop %v1851
      %v1853 = vmul.f32 %v1830, 1.442695
      %v1854 = vpow.pop %v1853
      %v1855 = vmul.f32 %v1831, 1.442695
      %v1856 = vpow.pop %v1855
      %v1857 = vmul.f32 %v1832, 1.442695
      %v1858 = vpow.pop %v1857
      %v1859 = vmul.f32 %v1833, 1.442695
      %v1860 = vpow.pop %v1859
      %v1861 = vmul.f32 %v1834, 1.442695
      %v1862 = vpow.pop %v1861
      %v1863 = vmul.f32 %v1835, 1.442695
      %v1864 = vpow.pop %v1863
      %v1865 = vmul.f32 %v1836, 1.442695
      %v1866 = vpow.pop %v1865
      %v1867 = vmul.f32 %v1837, 1.442695
      %v1868 = vpow.pop %v1867
      %v1869 = vmul.f32 %v1838, 1.442695
      %v1870 = vpow.pop %v1869
      %v1871 = vsel %vm393, %v1840, 0.0
      %v1872 = vsel %vm394, %v1842, 0.0
      %v1873 = vsel %vm395, %v1844, 0.0
      %v1874 = vsel %vm396, %v1846, 0.0
      %v1875 = vsel %vm397, %v1848, 0.0
      %v1876 = vsel %vm398, %v1850, 0.0
      %v1877 = vsel %vm399, %v1852, 0.0
      %v1878 = vsel %vm400, %v1854, 0.0
      %v1879 = vsel %vm401, %v1856, 0.0
      %v1880 = vsel %vm402, %v1858, 0.0
      %v1881 = vsel %vm403, %v1860, 0.0
      %v1882 = vsel %vm404, %v1862, 0.0
      %v1883 = vsel %vm405, %v1864, 0.0
      %v1884 = vsel %vm406, %v1866, 0.0
      %v1885 = vsel %vm407, %v1868, 0.0
      %v1886 = vsel %vm408, %v1870, 0.0
      %1887 = vadd.xlane.f32.xlu0 %v1871
      %v1888 = vpop.xlane.xlu0 %1887
      %1889 = vadd.xlane.f32.xlu0 %v1872
      %v1890 = vpop.xlane.xlu0 %1889
      %1891 = vadd.xlane.f32.xlu0 %v1873
      %v1892 = vpop.xlane.xlu0 %1891
      %1893 = vadd.xlane.f32.xlu0 %v1874
      %v1894 = vpop.xlane.xlu0 %1893
      %1895 = vadd.xlane.f32.xlu0 %v1875
      %v1896 = vpop.xlane.xlu0 %1895
      %1897 = vadd.xlane.f32.xlu0 %v1876
      %v1898 = vpop.xlane.xlu0 %1897
      %1899 = vadd.xlane.f32.xlu0 %v1877
      %v1900 = vpop.xlane.xlu0 %1899
      %1901 = vadd.xlane.f32.xlu0 %v1878
      %v1902 = vpop.xlane.xlu0 %1901
      %1903 = vadd.xlane.f32.xlu0 %v1879
      %v1904 = vpop.xlane.xlu0 %1903
      %1905 = vadd.xlane.f32.xlu0 %v1880
      %v1906 = vpop.xlane.xlu0 %1905
      %1907 = vadd.xlane.f32.xlu0 %v1881
      %v1908 = vpop.xlane.xlu0 %1907
      %1909 = vadd.xlane.f32.xlu0 %v1882
      %v1910 = vpop.xlane.xlu0 %1909
      %1911 = vadd.xlane.f32.xlu0 %v1883
      %v1912 = vpop.xlane.xlu0 %1911
      %1913 = vadd.xlane.f32.xlu0 %v1884
      %v1914 = vpop.xlane.xlu0 %1913
      %1915 = vadd.xlane.f32.xlu0 %v1885
      %v1916 = vpop.xlane.xlu0 %1915
      %1917 = vadd.xlane.f32.xlu0 %v1886
      %v1918 = vpop.xlane.xlu0 %1917
      %vm1919 = vcmp.gt.f32.partialorder %v1888, 0.0
      %vm1920 = vcmp.gt.f32.partialorder %v1890, 0.0
      %vm1921 = vcmp.gt.f32.partialorder %v1892, 0.0
      %vm1922 = vcmp.gt.f32.partialorder %v1894, 0.0
      %vm1923 = vcmp.gt.f32.partialorder %v1896, 0.0
      %vm1924 = vcmp.gt.f32.partialorder %v1898, 0.0
      %vm1925 = vcmp.gt.f32.partialorder %v1900, 0.0
      %vm1926 = vcmp.gt.f32.partialorder %v1902, 0.0
      %vm1927 = vcmp.gt.f32.partialorder %v1904, 0.0
      %vm1928 = vcmp.gt.f32.partialorder %v1906, 0.0
      %vm1929 = vcmp.gt.f32.partialorder %v1908, 0.0
      %vm1930 = vcmp.gt.f32.partialorder %v1910, 0.0
      %vm1931 = vcmp.gt.f32.partialorder %v1912, 0.0
      %vm1932 = vcmp.gt.f32.partialorder %v1914, 0.0
      %vm1933 = vcmp.gt.f32.partialorder %v1916, 0.0
      %vm1934 = vcmp.gt.f32.partialorder %v1918, 0.0
      %v1935 = vsel %vm1919, %v1888, 1.0
      %v1936 = vsel %vm1920, %v1890, 1.0
      %v1937 = vsel %vm1921, %v1892, 1.0
      %v1938 = vsel %vm1922, %v1894, 1.0
      %v1939 = vsel %vm1923, %v1896, 1.0
      %v1940 = vsel %vm1924, %v1898, 1.0
      %v1941 = vsel %vm1925, %v1900, 1.0
      %v1942 = vsel %vm1926, %v1902, 1.0
      %v1943 = vsel %vm1927, %v1904, 1.0
      %v1944 = vsel %vm1928, %v1906, 1.0
      %v1945 = vsel %vm1929, %v1908, 1.0
      %v1946 = vsel %vm1930, %v1910, 1.0
      %v1947 = vsel %vm1931, %v1912, 1.0
      %v1948 = vsel %vm1932, %v1914, 1.0
      %v1949 = vsel %vm1933, %v1916, 1.0
      %v1950 = vsel %vm1934, %v1918, 1.0
      %v1951 = vrcp.pop %v1935
      %v1952 = vrcp.pop %v1936
      %v1953 = vrcp.pop %v1937
      %v1954 = vrcp.pop %v1938
      %v1955 = vrcp.pop %v1939
      %v1956 = vrcp.pop %v1940
      %v1957 = vrcp.pop %v1941
      %v1958 = vrcp.pop %v1942
      %v1959 = vrcp.pop %v1943
      %v1960 = vrcp.pop %v1944
      %v1961 = vrcp.pop %v1945
      %v1962 = vrcp.pop %v1946
      %v1963 = vrcp.pop %v1947
      %v1964 = vrcp.pop %v1948
      %v1965 = vrcp.pop %v1949
      %v1966 = vrcp.pop %v1950
      %v1967 = vmul.f32 %v1871, %v1951
      %v1968 = vmul.f32 %v1872, %v1952
      %v1969 = vmul.f32 %v1873, %v1953
      %v1970 = vmul.f32 %v1874, %v1954
      %v1971 = vmul.f32 %v1875, %v1955
      %v1972 = vmul.f32 %v1876, %v1956
      %v1973 = vmul.f32 %v1877, %v1957
      %v1974 = vmul.f32 %v1878, %v1958
      %v1975 = vmul.f32 %v1879, %v1959
      %v1976 = vmul.f32 %v1880, %v1960
      %v1977 = vmul.f32 %v1881, %v1961
      %v1978 = vmul.f32 %v1882, %v1962
      %v1979 = vmul.f32 %v1883, %v1963
      %v1980 = vmul.f32 %v1884, %v1964
      %v1981 = vmul.f32 %v1885, %v1965
      %v1982 = vmul.f32 %v1886, %v1966
      %v1983 = vpack.c.bf16 %v1968, %v1967
      %v1984 = vpack.c.bf16 %v1970, %v1969
      %v1985 = vpack.c.bf16 %v1972, %v1971
      %v1986 = vpack.c.bf16 %v1974, %v1973
      %v1987 = vpack.c.bf16 %v1976, %v1975
      %v1988 = vpack.c.bf16 %v1978, %v1977
      %v1989 = vpack.c.bf16 %v1980, %v1979
      %v1990 = vpack.c.bf16 %v1982, %v1981
      %1999 = vrot.lane.b32.xlu0 %v1654, 96
      %v2000 = vpop.permute.xlu0 %1999
      %2001 = vrot.lane.b32.xlu0 %v1655, 96
      %v2002 = vpop.permute.xlu0 %2001
      %2003 = vrot.lane.b32.xlu0 %v1656, 96
      %v2004 = vpop.permute.xlu0 %2003
      %2005 = vrot.lane.b32.xlu0 %v1657, 96
      %v2006 = vpop.permute.xlu0 %2005
      %2007 = vrot.lane.b32.xlu0 %v1658, 96
      %v2008 = vpop.permute.xlu0 %2007
      %2009 = vrot.lane.b32.xlu0 %v1659, 96
      %v2010 = vpop.permute.xlu0 %2009
      %2011 = vrot.lane.b32.xlu0 %v1660, 96
      %v2012 = vpop.permute.xlu0 %2011
      %2013 = vrot.lane.b32.xlu0 %v1661, 96
      %v2014 = vpop.permute.xlu0 %2013
      %2023 = vmatpush.bf16.msra.mxu0 %v2014
      %2024 = vmatpush.bf16.msra.mxu0 %v2012
      %2025 = vmatpush.bf16.msra.mxu0 %v2010
      %2026 = vmatpush.bf16.msra.mxu0 %v2008
      %2027 = vmatpush.bf16.msra.mxu0 %v2006
      %2028 = vmatpush.bf16.msra.mxu0 %v2004
      %2029 = vmatpush.bf16.msra.mxu0 %v2002
      %2030 = vmatpush.bf16.msra.mxu0 %v2000
      %2031 = vmatmul.bf16.gmra.mxu0 %v1983
      %v2032 = vpop.f32.mrf.mxu0
      %v2033 = vadd.f32 0.0, %v2032
      %v2034 = vpop.f32.mrf.mxu0
      %v2035 = vadd.f32 0.0, %v2034
      %2036 = vmatmul.bf16.gmra.mxu0 %v1984
      %v2037 = vpop.f32.mrf.mxu0
      %v2038 = vadd.f32 0.0, %v2037
      %v2039 = vpop.f32.mrf.mxu0
      %v2040 = vadd.f32 0.0, %v2039
      %2041 = vmatmul.bf16.gmra.mxu0 %v1985
      %v2042 = vpop.f32.mrf.mxu0
      %v2043 = vadd.f32 0.0, %v2042
      %v2044 = vpop.f32.mrf.mxu0
      %v2045 = vadd.f32 0.0, %v2044
      %2046 = vmatmul.bf16.gmra.mxu0 %v1986
      %v2047 = vpop.f32.mrf.mxu0
      %v2048 = vadd.f32 0.0, %v2047
      %v2049 = vpop.f32.mrf.mxu0
      %v2050 = vadd.f32 0.0, %v2049
      %2051 = vmatmul.bf16.gmra.mxu0 %v1987
      %v2052 = vpop.f32.mrf.mxu0
      %v2053 = vadd.f32 0.0, %v2052
      %v2054 = vpop.f32.mrf.mxu0
      %v2055 = vadd.f32 0.0, %v2054
      %2056 = vmatmul.bf16.gmra.mxu0 %v1988
      %v2057 = vpop.f32.mrf.mxu0
      %v2058 = vadd.f32 0.0, %v2057
      %v2059 = vpop.f32.mrf.mxu0
      %v2060 = vadd.f32 0.0, %v2059
      %2061 = vmatmul.bf16.gmra.mxu0 %v1989
      %v2062 = vpop.f32.mrf.mxu0
      %v2063 = vadd.f32 0.0, %v2062
      %v2064 = vpop.f32.mrf.mxu0
      %v2065 = vadd.f32 0.0, %v2064
      %2066 = vmatmul.bf16.gmra.mxu0 %v1990
      %v2067 = vpop.f32.mrf.mxu0
      %v2068 = vadd.f32 0.0, %v2067
      %v2069 = vpop.f32.mrf.mxu0
      %v2070 = vadd.f32 0.0, %v2069
      %2071 = vdwg.mxu0
      %2088 = vrot.lane.b32.xlu0 %v2033, 64
      %v2089 = vpop.permute.xlu0 %2088
      %2090 = vrot.lane.b32.xlu0 %v2035, 64
      %v2091 = vpop.permute.xlu0 %2090
      %2092 = vrot.lane.b32.xlu0 %v2038, 64
      %v2093 = vpop.permute.xlu0 %2092
      %2094 = vrot.lane.b32.xlu0 %v2040, 64
      %v2095 = vpop.permute.xlu0 %2094
      %2096 = vrot.lane.b32.xlu0 %v2043, 64
      %v2097 = vpop.permute.xlu0 %2096
      %2098 = vrot.lane.b32.xlu0 %v2045, 64
      %v2099 = vpop.permute.xlu0 %2098
      %2100 = vrot.lane.b32.xlu0 %v2048, 64
      %v2101 = vpop.permute.xlu0 %2100
      %2102 = vrot.lane.b32.xlu0 %v2050, 64
      %v2103 = vpop.permute.xlu0 %2102
      %2104 = vrot.lane.b32.xlu0 %v2053, 64
      %v2105 = vpop.permute.xlu0 %2104
      %2106 = vrot.lane.b32.xlu0 %v2055, 64
      %v2107 = vpop.permute.xlu0 %2106
      %2108 = vrot.lane.b32.xlu0 %v2058, 64
      %v2109 = vpop.permute.xlu0 %2108
      %2110 = vrot.lane.b32.xlu0 %v2060, 64
      %v2111 = vpop.permute.xlu0 %2110
      %2112 = vrot.lane.b32.xlu0 %v2063, 64
      %v2113 = vpop.permute.xlu0 %2112
      %2114 = vrot.lane.b32.xlu0 %v2065, 64
      %v2115 = vpop.permute.xlu0 %2114
      %2116 = vrot.lane.b32.xlu0 %v2068, 64
      %v2117 = vpop.permute.xlu0 %2116
      %2118 = vrot.lane.b32.xlu0 %v2070, 64
      %v2119 = vpop.permute.xlu0 %2118
      %v2136 = vadd.f32 %v1477, %v2089
      %v2137 = vadd.f32 %v1479, %v2091
      %v2138 = vadd.f32 %v1482, %v2093
      %v2139 = vadd.f32 %v1484, %v2095
      %v2140 = vadd.f32 %v1487, %v2097
      %v2141 = vadd.f32 %v1489, %v2099
      %v2142 = vadd.f32 %v1492, %v2101
      %v2143 = vadd.f32 %v1494, %v2103
      %v2144 = vadd.f32 %v1497, %v2105
      %v2145 = vadd.f32 %v1499, %v2107
      %v2146 = vadd.f32 %v1502, %v2109
      %v2147 = vadd.f32 %v1504, %v2111
      %v2148 = vadd.f32 %v1507, %v2113
      %v2149 = vadd.f32 %v1509, %v2115
      %v2150 = vadd.f32 %v1512, %v2117
      %v2151 = vadd.f32 %v1514, %v2119
      %2168 = vrot.lane.b32.xlu0 %v1477, 32
      %v2169 = vpop.permute.xlu0 %2168
      %2170 = vrot.lane.b32.xlu0 %v1479, 32
      %v2171 = vpop.permute.xlu0 %2170
      %2172 = vrot.lane.b32.xlu0 %v1482, 32
      %v2173 = vpop.permute.xlu0 %2172
      %2174 = vrot.lane.b32.xlu0 %v1484, 32
      %v2175 = vpop.permute.xlu0 %2174
      %2176 = vrot.lane.b32.xlu0 %v1487, 32
      %v2177 = vpop.permute.xlu0 %2176
      %2178 = vrot.lane.b32.xlu0 %v1489, 32
      %v2179 = vpop.permute.xlu0 %2178
      %2180 = vrot.lane.b32.xlu0 %v1492, 32
      %v2181 = vpop.permute.xlu0 %2180
      %2182 = vrot.lane.b32.xlu0 %v1494, 32
      %v2183 = vpop.permute.xlu0 %2182
      %2184 = vrot.lane.b32.xlu0 %v1497, 32
      %v2185 = vpop.permute.xlu0 %2184
      %2186 = vrot.lane.b32.xlu0 %v1499, 32
      %v2187 = vpop.permute.xlu0 %2186
      %2188 = vrot.lane.b32.xlu0 %v1502, 32
      %v2189 = vpop.permute.xlu0 %2188
      %2190 = vrot.lane.b32.xlu0 %v1504, 32
      %v2191 = vpop.permute.xlu0 %2190
      %2192 = vrot.lane.b32.xlu0 %v1507, 32
      %v2193 = vpop.permute.xlu0 %2192
      %2194 = vrot.lane.b32.xlu0 %v1509, 32
      %v2195 = vpop.permute.xlu0 %2194
      %2196 = vrot.lane.b32.xlu0 %v1512, 32
      %v2197 = vpop.permute.xlu0 %2196
      %2198 = vrot.lane.b32.xlu0 %v1514, 32
      %v2199 = vpop.permute.xlu0 %2198
      %v2216 = vadd.f32 %v2136, %v2169
      %v2217 = vadd.f32 %v2137, %v2171
      %v2218 = vadd.f32 %v2138, %v2173
      %v2219 = vadd.f32 %v2139, %v2175
      %v2220 = vadd.f32 %v2140, %v2177
      %v2221 = vadd.f32 %v2141, %v2179
      %v2222 = vadd.f32 %v2142, %v2181
      %v2223 = vadd.f32 %v2143, %v2183
      %v2224 = vadd.f32 %v2144, %v2185
      %v2225 = vadd.f32 %v2145, %v2187
      %v2226 = vadd.f32 %v2146, %v2189
      %v2227 = vadd.f32 %v2147, %v2191
      %v2228 = vadd.f32 %v2148, %v2193
      %v2229 = vadd.f32 %v2149, %v2195
      %v2230 = vadd.f32 %v2150, %v2197
      %v2231 = vadd.f32 %v2151, %v2199
      %v2232 = vtanh.pop %v2216
      %v2233 = vtanh.pop %v2217
      %v2234 = vtanh.pop %v2218
      %v2235 = vtanh.pop %v2219
      %v2236 = vtanh.pop %v2220
      %v2237 = vtanh.pop %v2221
      %v2238 = vtanh.pop %v2222
      %v2239 = vtanh.pop %v2223
      %v2240 = vtanh.pop %v2224
      %v2241 = vtanh.pop %v2225
      %v2242 = vtanh.pop %v2226
      %v2243 = vtanh.pop %v2227
      %v2244 = vtanh.pop %v2228
      %v2245 = vtanh.pop %v2229
      %v2246 = vtanh.pop %v2230
      %v2247 = vtanh.pop %v2231
      %v2248 = vmul.f32 %v2232, 0.1
      %v2249 = vmul.f32 %v2233, 0.1
      %v2250 = vmul.f32 %v2234, 0.1
      %v2251 = vmul.f32 %v2235, 0.1
      %v2252 = vmul.f32 %v2236, 0.1
      %v2253 = vmul.f32 %v2237, 0.1
      %v2254 = vmul.f32 %v2238, 0.1
      %v2255 = vmul.f32 %v2239, 0.1
      %v2256 = vmul.f32 %v2240, 0.1
      %v2257 = vmul.f32 %v2241, 0.1
      %v2258 = vmul.f32 %v2242, 0.1
      %v2259 = vmul.f32 %v2243, 0.1
      %v2260 = vmul.f32 %v2244, 0.1
      %v2261 = vmul.f32 %v2245, 0.1
      %v2262 = vmul.f32 %v2246, 0.1
      %v2263 = vmul.f32 %v2247, 0.1
      %2280 = vrot.lane.b32.xlu0 %v2248, 64
      %v2281 = vpop.permute.xlu0 %2280
      %2282 = vrot.lane.b32.xlu0 %v2249, 64
      %v2283 = vpop.permute.xlu0 %2282
      %2284 = vrot.lane.b32.xlu0 %v2250, 64
      %v2285 = vpop.permute.xlu0 %2284
      %2286 = vrot.lane.b32.xlu0 %v2251, 64
      %v2287 = vpop.permute.xlu0 %2286
      %2288 = vrot.lane.b32.xlu0 %v2252, 64
      %v2289 = vpop.permute.xlu0 %2288
      %2290 = vrot.lane.b32.xlu0 %v2253, 64
      %v2291 = vpop.permute.xlu0 %2290
      %2292 = vrot.lane.b32.xlu0 %v2254, 64
      %v2293 = vpop.permute.xlu0 %2292
      %2294 = vrot.lane.b32.xlu0 %v2255, 64
      %v2295 = vpop.permute.xlu0 %2294
      %2296 = vrot.lane.b32.xlu0 %v2256, 64
      %v2297 = vpop.permute.xlu0 %2296
      %2298 = vrot.lane.b32.xlu0 %v2257, 64
      %v2299 = vpop.permute.xlu0 %2298
      %2300 = vrot.lane.b32.xlu0 %v2258, 64
      %v2301 = vpop.permute.xlu0 %2300
      %2302 = vrot.lane.b32.xlu0 %v2259, 64
      %v2303 = vpop.permute.xlu0 %2302
      %2304 = vrot.lane.b32.xlu0 %v2260, 64
      %v2305 = vpop.permute.xlu0 %2304
      %2306 = vrot.lane.b32.xlu0 %v2261, 64
      %v2307 = vpop.permute.xlu0 %2306
      %2308 = vrot.lane.b32.xlu0 %v2262, 64
      %v2309 = vpop.permute.xlu0 %2308
      %2310 = vrot.lane.b32.xlu0 %v2263, 64
      %v2311 = vpop.permute.xlu0 %2310
      %v2328 = vadd.f32 %v1419, %v2281
      %v2329 = vadd.f32 %v1420, %v2283
      %v2330 = vadd.f32 %v1421, %v2285
      %v2331 = vadd.f32 %v1422, %v2287
      %v2332 = vadd.f32 %v1423, %v2289
      %v2333 = vadd.f32 %v1424, %v2291
      %v2334 = vadd.f32 %v1425, %v2293
      %v2335 = vadd.f32 %v1426, %v2295
      %v2336 = vadd.f32 %v1427, %v2297
      %v2337 = vadd.f32 %v1428, %v2299
      %v2338 = vadd.f32 %v1429, %v2301
      %v2339 = vadd.f32 %v1430, %v2303
      %v2340 = vadd.f32 %v1431, %v2305
      %v2341 = vadd.f32 %v1432, %v2307
      %v2342 = vadd.f32 %v1433, %v2309
      %v2343 = vadd.f32 %v1434, %v2311
      %2344 = vst.msk [vmem:[%s342] sm:$0xff] %vm473, %v2328
      %2345 = vst.msk [vmem:[%s342 + $0x8] sm:$0xff] %vm473, %v2329
      %2346 = vst.msk [vmem:[%s342 + $0x10] sm:$0xff] %vm473, %v2330
      %2347 = vst.msk [vmem:[%s342 + $0x18] sm:$0xff] %vm473, %v2331
      %2348 = vst.msk [vmem:[%s342 + $0x20] sm:$0xff] %vm473, %v2332
      %2349 = vst.msk [vmem:[%s342 + $0x28] sm:$0xff] %vm473, %v2333
      %2350 = vst.msk [vmem:[%s342 + $0x30] sm:$0xff] %vm473, %v2334
      %2351 = vst.msk [vmem:[%s342 + $0x38] sm:$0xff] %vm473, %v2335
      %2352 = vst.msk [vmem:[%s342 + $0x40] sm:$0xff] %vm473, %v2336
      %2353 = vst.msk [vmem:[%s342 + $0x48] sm:$0xff] %vm473, %v2337
      %2354 = vst.msk [vmem:[%s342 + $0x50] sm:$0xff] %vm473, %v2338
      %2355 = vst.msk [vmem:[%s342 + $0x58] sm:$0xff] %vm473, %v2339
      %2356 = vst.msk [vmem:[%s342 + $0x60] sm:$0xff] %vm473, %v2340
      %2357 = vst.msk [vmem:[%s342 + $0x68] sm:$0xff] %vm473, %v2341
      %2358 = vst.msk [vmem:[%s342 + $0x70] sm:$0xff] %vm473, %v2342
      %2359 = vst.msk [vmem:[%s342 + $0x78] sm:$0xff] %vm473, %v2343
      %s2360 = smul.u32 16, %s18
      %p2361 = scmp.lt.s32.totalorder %s2360, 31
      %s2362 = scalar_select %p2361, %s2360, 31
      %s2363 = smul.addr %s2362, 8
      %s2364 = scalar_lea.vmem %s7, %s2363
      // Predicated region
      $region49: #{tpu_custom_call.1} parent=47 // pred_check
        %p2365 = pneg %p203
      $region50: #{tpu_custom_call.1} parent=47 // pred_check_branch
        %2367 = sbr.rel (%p2365) target = $region52
      $region51: #{tpu_custom_call.1} parent=47 // pred_region
        %s2368 = smul.u32 16, %s18
      $region52: #{tpu_custom_call.1} parent=47 // pred_fallthru
        _
    $region48: #{tpu_custom_call.1} parent=5 // pred_fallthru
      _
    %p2369 = scmp.le.s32.totalorder 2, %s13
    // Predicated region
    $region53: #{tpu_custom_call.1} parent=5 // pred_check
      %p2370 = pneg %p2369
    $region54: #{tpu_custom_call.1} parent=5 // pred_check_branch
      %2372 = sbr.rel (%p2370) target = $region56
    $region55: #{tpu_custom_call.1} parent=5 // pred_region
      %s2373 = ssub.s32 %s13, 2
      // Predicated region
      $region57: #{tpu_custom_call.1} parent=55 // pred_check
        %p2374 = pneg %p209
      $region58: #{tpu_custom_call.1} parent=55 // pred_check_branch
        %2376 = sbr.rel (%p2374) target = $region60
      $region59: #{tpu_custom_call.1} parent=55 // pred_region
        %s2377 = smul.u32 16, %s19
        %p2378 = scmp.lt.s32.totalorder %s2377, 31
        %s2379 = scalar_select %p2378, %s2377, 31
        %s2380 = smul.addr %s2379, 8
        %s2381 = scalar_lea.vmem %s7, %s2380
      $region60: #{tpu_custom_call.1} parent=55 // pred_fallthru
        _
    $region56: #{tpu_custom_call.1} parent=5 // pred_fallthru
      _
  $region6: #{tpu_custom_call.1} parent=0 // loop_footer
    %s17 = sadd.s32 1, %s13
  $region7: #{tpu_custom_call.1} parent=0 // loop_footer_branch
    %12 = sbr.rel target = $region3
  $region8: #{tpu_custom_call.1} parent=0 // loop_exit
    _

</llo_original>
